<compile_context>
chip_gen: v7x
topology: tpu7x:2x2x1
jax: 0.10.0
libtpu: 0.0.40
codegen_flags: <defaults>
</compile_context>

<pallas_src>
import jax
import jax.numpy as jnp
from jax.experimental import pallas as pl
from jax.experimental.pallas import tpu as pltpu


def _self_attn_kernel(x_ref, wt_ref, wpg_ref, wo_ref, bt_ref, bpg_ref, bo_ref,
                      o_ref, g_scr, phi_scr):
    """One (batch, query-tile) step of the Self_Attn forward.

    x_ref:   (N, C)        f32, polyphase-ordered pixels, channels on lanes
                           (batch dim squeezed; same block across all q tiles)
    wt_ref:  (C, C8)       bf16 theta weight
    wpg_ref: (C, C2+C8)    bf16 fused [g | phi] weight
    wo_ref:  (C2, C)       bf16 output weight, pre-scaled by sigma
    b*_ref:  (1, .)        f32 biases (bo pre-scaled by sigma)
    o_ref:   (TQ, C)       f32 out tile = x_tile + sigma * attn_out
    g_scr:   (N/4, C2)     bf16 scratch, pooled g   (filled at q == 0)
    phi_scr: (N/4, C8)     bf16 scratch, pooled phi (filled at q == 0)
    """
    q = pl.program_id(1)
    n = x_ref.shape[0]
    tq = o_ref.shape[0]
    n4 = n // 4
    c8 = wt_ref.shape[1]
    c2 = wo_ref.shape[0]

    # --- per-batch (q == 0): fused phi/g projection + 2x2 max-pool, cached ---
    @pl.when(q == 0)
    def _():
        x_full = x_ref[...].astype(jnp.bfloat16)                       # (N, C)
        pg = jnp.dot(x_full, wpg_ref[...],
                     preferred_element_type=jnp.float32) + bpg_ref[...]
        # Polyphase rows: each pool window is the same row of 4 contiguous slabs.
        pg_p = jnp.maximum(jnp.maximum(pg[0:n4], pg[n4:2 * n4]),
                           jnp.maximum(pg[2 * n4:3 * n4], pg[3 * n4:4 * n4]))
        g_scr[...] = pg_p[:, :c2].astype(jnp.bfloat16)                 # (N/4, C2)
        phi_scr[...] = pg_p[:, c2:].astype(jnp.bfloat16)               # (N/4, C8)

    # --- per query tile ---
    row0 = pl.multiple_of(q * tq, tq)
    xq32 = x_ref[pl.ds(row0, tq), :]                                   # (TQ, C) f32 (residual)
    xq = xq32.astype(jnp.bfloat16)

    theta = jnp.dot(xq, wt_ref[...],
                    preferred_element_type=jnp.float32) + bt_ref[...]  # (TQ, C8)

    logits = jax.lax.dot_general(theta.astype(jnp.bfloat16), phi_scr[...],
                                 (((1,), (1,)), ((), ())),
                                 preferred_element_type=jnp.float32)   # (TQ, N/4)

    m = jnp.max(logits, axis=-1, keepdims=True)
    e = jnp.exp(logits - m)                                            # f32 EUP
    rsum = jnp.sum(e, axis=-1, keepdims=True)                          # (TQ, 1) f32

    # Deferred softmax normalization: (e @ g_p) * (1/rowsum)  (algebraically
    # identical to softmax(logits) @ g_p, avoids the full-matrix divide).
    og = jnp.dot(e.astype(jnp.bfloat16), g_scr[...],
                 preferred_element_type=jnp.float32)                   # (TQ, C2)
    og = og * pl.reciprocal(rsum, approx=True)

    o = jnp.dot(og.astype(jnp.bfloat16), wo_ref[...],
                preferred_element_type=jnp.float32) + bo_ref[...]      # (TQ, C)

    o_ref[...] = (xq32 + o).astype(o_ref.dtype)


def _spectral_normalize(w, u):
    """Mirror of the module's SpectralNorm.compute_weight (one power step)."""
    out_c = w.shape[0]
    w_mat = w.reshape(out_c, -1)
    v = w_mat.T @ u
    v = v / jnp.linalg.norm(v)
    u2 = w_mat @ v
    u2 = u2 / jnp.linalg.norm(u2)
    sig = (u2.T @ w_mat @ v)[0, 0]
    return (w_mat / sig).reshape(w.shape)


@jax.jit
def self_attn_forward(x, w_theta, b_theta, u_theta, w_phi, b_phi, u_phi,
                      w_g, b_g, u_g, w_attn, b_attn, u_attn, sigma):
    """Self_Attn forward.  x: (B, C, H, W) NCHW; conv weights in PyTorch
    (out, in, 1, 1) layout; u_* are the SpectralNorm `u` vectors (out, 1)."""
    b, c, h, w = x.shape
    c8, c2 = c // 8, c // 2
    h2, w2 = h // 2, w // 2
    n = h * w
    n4 = n // 4

    # --- glue: spectral-norm the conv weights (tiny matvecs), fold sigma ---
    wt = _spectral_normalize(w_theta, u_theta)[:, :, 0, 0].T           # (C, C8)
    wp = _spectral_normalize(w_phi, u_phi)[:, :, 0, 0].T               # (C, C8)
    wg = _spectral_normalize(w_g, u_g)[:, :, 0, 0].T                   # (C, C2)
    wo = sigma * _spectral_normalize(w_attn, u_attn)[:, :, 0, 0].T     # (C2, C)

    # bf16 MXU operands; fuse [g | phi] so the pool runs once on one slab.
    wt_b = wt.astype(jnp.bfloat16)
    wpg_b = jnp.concatenate([wg, wp], axis=1).astype(jnp.bfloat16)     # (C, C2+C8)
    wo_b = wo.astype(jnp.bfloat16)
    bt = b_theta.reshape(1, c8).astype(jnp.float32)
    bpg = jnp.concatenate([b_g, b_phi]).reshape(1, c2 + c8).astype(jnp.float32)
    bo = (sigma * b_attn).reshape(1, c).astype(jnp.float32)

    # --- glue: NCHW -> polyphase-ordered, channels-last (B, N, C) ---
    xt = jnp.transpose(x, (0, 2, 3, 1)).reshape(b, h2, 2, w2, 2, c)
    x_perm = jnp.transpose(xt, (0, 2, 4, 1, 3, 5)).reshape(b, n, c)

    # Query tile: bounds the (TQ, N/4) logits buffer and gives the pipeline
    # many steps.  TQ | N and TQ % 8 == 0.
    tq = min(512, n // 2) if n >= 16 else n
    if tq % 8 != 0 or n % tq != 0:
        tq = n
    nq = n // tq

    flops = b * (2 * n * c * c8                 # theta projection
                 + 2 * n * c * (c2 + c8)        # fused g|phi projection
                 + 2 * n * n4 * c8              # logits
                 + 2 * n * n4 * c2              # attn @ g
                 + 2 * n * c2 * c)              # final 1x1 conv
    transcendentals = b * (n * n4 + n)          # exp + row reciprocals
    bytes_accessed = (b * n * c * 4 * 2
                      + 2 * (c * c8 + c * (c2 + c8) + c2 * c)
                      + 4 * (c8 + (c2 + c8) + c))
    cost = pl.CostEstimate(flops=int(flops),
                           transcendentals=int(transcendentals),
                           bytes_accessed=int(bytes_accessed))

    out_perm = pl.pallas_call(
        _self_attn_kernel,
        out_shape=jax.ShapeDtypeStruct((b, n, c), x.dtype),
        grid_spec=pltpu.PrefetchScalarGridSpec(
            num_scalar_prefetch=0,
            grid=(b, nq),
            in_specs=[
                # x: full batch element, resident across all q tiles of batch i
                pl.BlockSpec((None, n, c), lambda i, q: (i, 0, 0)),
                pl.BlockSpec((c, c8), lambda i, q: (0, 0)),        # Wt
                pl.BlockSpec((c, c2 + c8), lambda i, q: (0, 0)),   # [Wg|Wp]
                pl.BlockSpec((c2, c), lambda i, q: (0, 0)),        # Wo (sigma-scaled)
                pl.BlockSpec((1, c8), lambda i, q: (0, 0)),        # bt
                pl.BlockSpec((1, c2 + c8), lambda i, q: (0, 0)),   # [bg|bp]
                pl.BlockSpec((1, c), lambda i, q: (0, 0)),         # bo (sigma-scaled)
            ],
            out_specs=pl.BlockSpec((None, tq, c), lambda i, q: (i, q, 0)),
            scratch_shapes=[pltpu.VMEM((n4, c2), jnp.bfloat16),    # pooled g cache
                            pltpu.VMEM((n4, c8), jnp.bfloat16)],   # pooled phi cache
        ),
        compiler_params=pltpu.CompilerParams(
            # Batch shards across TensorCores; q axis is "arbitrary" because the
            # pl.when(q==0) scratch cache must not be split across cores.
            dimension_semantics=("parallel", "arbitrary"),
            vmem_limit_bytes=48 * 1024 * 1024),
        cost_estimate=cost,
    )(x_perm, wt_b, wpg_b, wo_b, bt, bpg, bo)

    # --- glue: invert the polyphase permutation, back to NCHW ---
    out = out_perm.reshape(b, 2, 2, h2, w2, c)
    out = jnp.transpose(out, (0, 3, 1, 4, 2, 5)).reshape(b, h, w, c)
    return jnp.transpose(out, (0, 3, 1, 2))


def _reference(x, w_theta, b_theta, u_theta, w_phi, b_phi, u_phi,
               w_g, b_g, u_g, w_attn, b_attn, u_attn, sigma):
    """Pure-JAX reference of the Self_Attn forward (NCHW)."""
    b, c, h, w = x.shape
    c8, c2 = c // 8, c // 2

    def conv1x1(t, w_, bias):
        return jnp.einsum('bchw,oc->bohw', t, w_[:, :, 0, 0]) + bias[None, :, None, None]

    def maxpool(t):
        bb, cc, hh_, ww_ = t.shape
        return t.reshape(bb, cc, hh_ // 2, 2, ww_ // 2, 2).max(axis=(3, 5))

    theta = conv1x1(x, _spectral_normalize(w_theta, u_theta), b_theta).reshape(b, c8, h * w)
    phi = maxpool(conv1x1(x, _spectral_normalize(w_phi, u_phi), b_phi)).reshape(b, c8, h * w // 4)
    attn = jax.nn.softmax(jnp.einsum('bcn,bcm->bnm', theta, phi), axis=-1)
    g = maxpool(conv1x1(x, _spectral_normalize(w_g, u_g), b_g)).reshape(b, c2, h * w // 4)
    attn_g = jnp.einsum('bcm,bnm->bcn', g, attn).reshape(b, c2, h, w)
    attn_g = conv1x1(attn_g, _spectral_normalize(w_attn, u_attn), b_attn)
    return x + sigma * attn_g


if __name__ == "__main__":
    # Small deterministic setup: Self_Attn(in_channels=64) on 16x16 features.
    # (in_channels must be >= 8 since the module uses C//8 query/key channels.)
    batch, in_ch, hh, ww = 2, 64, 16, 16
    c8, c2 = in_ch // 8, in_ch // 2

    key = jax.random.PRNGKey(0)
    keys = jax.random.split(key, 5)
    x = jax.random.normal(keys[0], (batch, in_ch, hh, ww), jnp.float32)

    def conv_params(k, out_c, in_c):
        k1, k2, k3 = jax.random.split(k, 3)
        bound = 1.0 / (in_c ** 0.5)   # nn.Conv2d default init bound for 1x1 kernel
        w_ = jax.random.uniform(k1, (out_c, in_c, 1, 1), jnp.float32, -bound, bound)
        b_ = jax.random.uniform(k2, (out_c,), jnp.float32, -bound, bound)
        u_ = 0.1 * jax.random.normal(k3, (out_c, 1), jnp.float32)  # SpectralNorm u
        return w_, b_, u_

    w_theta, b_theta, u_theta = conv_params(keys[1], c8, in_ch)
    w_phi, b_phi, u_phi = conv_params(keys[2], c8, in_ch)
    w_g, b_g, u_g = conv_params(keys[3], c2, in_ch)
    w_attn, b_attn, u_attn = conv_params(keys[4], in_ch, c2)
    # Module initializes sigma = 0 (out == x, degenerate); use a nonzero value
    # so the attention path is actually exercised and checked.
    sigma = jnp.float32(0.5)

    out = self_attn_forward(x, w_theta, b_theta, u_theta, w_phi, b_phi, u_phi,
                            w_g, b_g, u_g, w_attn, b_attn, u_attn, sigma)
    out = jax.block_until_ready(out)

    ref = _reference(x, w_theta, b_theta, u_theta, w_phi, b_phi, u_phi,
                     w_g, b_g, u_g, w_attn, b_attn, u_attn, sigma)
    assert out.shape == (batch, in_ch, hh, ww), out.shape
    # Tolerance loosened vs. the f32 version: MXU operands / attention weights
    # are bf16 (accumulation stays f32).
    assert jnp.allclose(out, ref, atol=5e-2, rtol=5e-2), \
        float(jnp.max(jnp.abs(out - ref)))
    print("KERNEL_OK")
</pallas_src>

<mosaic_0001>
module attributes {stable_mosaic.version = 11 : i64} {
  func.func @_self_attn_kernel(%arg0: i32, %arg1: i32, %arg2: memref<1x256x64xf32, #tpu.memory_space<vmem>>, %arg3: memref<64x8xbf16, #tpu.memory_space<vmem>>, %arg4: memref<64x40xbf16, #tpu.memory_space<vmem>>, %arg5: memref<32x64xbf16, #tpu.memory_space<vmem>>, %arg6: memref<1x8xf32, #tpu.memory_space<vmem>>, %arg7: memref<1x40xf32, #tpu.memory_space<vmem>>, %arg8: memref<1x64xf32, #tpu.memory_space<vmem>>, %arg9: memref<1x128x64xf32, #tpu.memory_space<vmem>>, %arg10: memref<64x32xbf16, #tpu.memory_space<vmem>>, %arg11: memref<64x8xbf16, #tpu.memory_space<vmem>>) attributes {dimension_semantics = [#tpu.dimension_semantics<parallel>, #tpu.dimension_semantics<arbitrary>], iteration_bounds = array<i64: 2, 2>, scalar_prefetch = 0 : i64, scratch_operands = 2 : i64, tpu.core_type = #tpu.core_type<tc>, window_params = [{transform_indices = @transform_0, window_bounds = array<i64: 1, 256, 64>}, {pipeline_mode = #tpu.pipeline_mode<synchronous>, transform_indices = @transform_1, window_bounds = array<i64: 64, 8>}, {pipeline_mode = #tpu.pipeline_mode<synchronous>, transform_indices = @transform_2, window_bounds = array<i64: 64, 40>}, {pipeline_mode = #tpu.pipeline_mode<synchronous>, transform_indices = @transform_3, window_bounds = array<i64: 32, 64>}, {pipeline_mode = #tpu.pipeline_mode<synchronous>, transform_indices = @transform_4, window_bounds = array<i64: 1, 8>}, {pipeline_mode = #tpu.pipeline_mode<synchronous>, transform_indices = @transform_5, window_bounds = array<i64: 1, 40>}, {pipeline_mode = #tpu.pipeline_mode<synchronous>, transform_indices = @transform_6, window_bounds = array<i64: 1, 64>}, {transform_indices = @transform_7, window_bounds = array<i64: 1, 128, 64>}]} {
    %c0_i32 = arith.constant 0 : i32
    %0 = arith.cmpi eq, %arg1, %c0_i32 : i32
    %1 = arith.extui %0 : i1 to i32
    %c0_i32_0 = arith.constant 0 : i32
    %2 = arith.cmpi ne, %1, %c0_i32_0 : i32
    scf.if %2 {
      %c0_22 = arith.constant 0 : index
      %c0_23 = arith.constant 0 : index
      %c0_24 = arith.constant 0 : index
      %40 = vector.load %arg2[%c0_22, %c0_23, %c0_24] : memref<1x256x64xf32, #tpu.memory_space<vmem>>, vector<1x256x64xf32>
      %41 = vector.shape_cast %40 : vector<1x256x64xf32> to vector<256x64xf32>
      %42 = arith.truncf %41 : vector<256x64xf32> to vector<256x64xbf16>
      %c0_25 = arith.constant 0 : index
      %c0_26 = arith.constant 0 : index
      %43 = vector.load %arg4[%c0_25, %c0_26] : memref<64x40xbf16, #tpu.memory_space<vmem>>, vector<64x40xbf16>
      %cst_27 = arith.constant dense<0.000000e+00> : vector<256x40xf32>
      %44 = tpu.matmul %42, %43, %cst_27 {dimension_numbers = #tpu.dot_dimension_numbers<[1], [0], [0], [1], [0, 0, 1, 1], [], []>} : vector<256x64xbf16>, vector<64x40xbf16>, vector<256x40xf32> -> vector<256x40xf32>
      %c0_28 = arith.constant 0 : index
      %c0_29 = arith.constant 0 : index
      %45 = vector.load %arg7[%c0_28, %c0_29] : memref<1x40xf32, #tpu.memory_space<vmem>>, vector<1x40xf32>
      %46 = vector.broadcast %45 : vector<1x40xf32> to vector<256x40xf32>
      %47 = arith.addf %44, %46 : vector<256x40xf32>
      %48 = vector.extract_strided_slice %47 {offsets = [0, 0], sizes = [64, 40], strides = [1, 1]} : vector<256x40xf32> to vector<64x40xf32>
      %49 = vector.extract_strided_slice %47 {offsets = [64, 0], sizes = [64, 40], strides = [1, 1]} : vector<256x40xf32> to vector<64x40xf32>
      %50 = arith.maximumf %48, %49 : vector<64x40xf32>
      %51 = vector.extract_strided_slice %47 {offsets = [128, 0], sizes = [64, 40], strides = [1, 1]} : vector<256x40xf32> to vector<64x40xf32>
      %52 = vector.extract_strided_slice %47 {offsets = [192, 0], sizes = [64, 40], strides = [1, 1]} : vector<256x40xf32> to vector<64x40xf32>
      %53 = arith.maximumf %51, %52 : vector<64x40xf32>
      %54 = arith.maximumf %50, %53 : vector<64x40xf32>
      %55 = vector.extract_strided_slice %54 {offsets = [0, 0], sizes = [64, 32], strides = [1, 1]} : vector<64x40xf32> to vector<64x32xf32>
      %56 = arith.truncf %55 : vector<64x32xf32> to vector<64x32xbf16>
      %c0_30 = arith.constant 0 : index
      %c0_31 = arith.constant 0 : index
      %57 = vector.load %arg10[%c0_30, %c0_31] : memref<64x32xbf16, #tpu.memory_space<vmem>>, vector<64x32xbf16>
      tpu.vector_store %arg10[%c0_30, %c0_31], %56 {strides = array<i32>} : memref<64x32xbf16, #tpu.memory_space<vmem>>, vector<64x32xbf16>,
      %58 = vector.extract_strided_slice %54 {offsets = [0, 32], sizes = [64, 8], strides = [1, 1]} : vector<64x40xf32> to vector<64x8xf32>
      %59 = arith.truncf %58 : vector<64x8xf32> to vector<64x8xbf16>
      %c0_32 = arith.constant 0 : index
      %c0_33 = arith.constant 0 : index
      %60 = vector.load %arg11[%c0_32, %c0_33] : memref<64x8xbf16, #tpu.memory_space<vmem>>, vector<64x8xbf16>
      tpu.vector_store %arg11[%c0_32, %c0_33], %59 {strides = array<i32>} : memref<64x8xbf16, #tpu.memory_space<vmem>>, vector<64x8xbf16>,
    } else {
    }
    %c128_i32 = arith.constant 128 : i32
    %3 = arith.muli %arg1, %c128_i32 : i32
    %4 = tpu.assume_multiple %3, 128 : i32
    %c0 = arith.constant 0 : index
    %5 = arith.index_cast %4 : i32 to index
    %c0_1 = arith.constant 0 : index
    %6 = vector.load %arg2[%c0, %5, %c0_1] : memref<1x256x64xf32, #tpu.memory_space<vmem>>, vector<1x128x64xf32>
    %7 = vector.shape_cast %6 : vector<1x128x64xf32> to vector<128x64xf32>
    %8 = arith.truncf %7 : vector<128x64xf32> to vector<128x64xbf16>
    %c0_2 = arith.constant 0 : index
    %c0_3 = arith.constant 0 : index
    %9 = vector.load %arg3[%c0_2, %c0_3] : memref<64x8xbf16, #tpu.memory_space<vmem>>, vector<64x8xbf16>
    %cst = arith.constant dense<0.000000e+00> : vector<128x8xf32>
    %10 = tpu.matmul %8, %9, %cst {dimension_numbers = #tpu.dot_dimension_numbers<[1], [0], [0], [1], [0, 0, 1, 1], [], []>} : vector<128x64xbf16>, vector<64x8xbf16>, vector<128x8xf32> -> vector<128x8xf32>
    %c0_4 = arith.constant 0 : index
    %c0_5 = arith.constant 0 : index
    %11 = vector.load %arg6[%c0_4, %c0_5] : memref<1x8xf32, #tpu.memory_space<vmem>>, vector<1x8xf32>
    %12 = vector.broadcast %11 : vector<1x8xf32> to vector<128x8xf32>
    %13 = arith.addf %10, %12 : vector<128x8xf32>
    %14 = arith.truncf %13 : vector<128x8xf32> to vector<128x8xbf16>
    %c0_6 = arith.constant 0 : index
    %c0_7 = arith.constant 0 : index
    %15 = vector.load %arg11[%c0_6, %c0_7] : memref<64x8xbf16, #tpu.memory_space<vmem>>, vector<64x8xbf16>
    %cst_8 = arith.constant dense<0.000000e+00> : vector<128x64xf32>
    %16 = tpu.matmul %14, %15, %cst_8 {dimension_numbers = #tpu.dot_dimension_numbers<[1], [1], [0], [0], [0, 0, 1, 0], [], []>} : vector<128x8xbf16>, vector<64x8xbf16>, vector<128x64xf32> -> vector<128x64xf32>
    %cst_9 = arith.constant dense<0xFF800000> : vector<128xf32>
    %17 = vector.multi_reduction <maximumf>, %16, %cst_9 [1] : vector<128x64xf32> to vector<128xf32>
    %18 = vector.shape_cast %17 : vector<128xf32> to vector<128x1xf32>
    %19 = vector.broadcast %18 : vector<128x1xf32> to vector<128x64xf32>
    %20 = arith.subf %16, %19 : vector<128x64xf32>
    %21 = math.exp %20 : vector<128x64xf32>
    %cst_10 = arith.constant dense<0.000000e+00> : vector<128xf32>
    %22 = vector.multi_reduction <add>, %21, %cst_10 [1] : vector<128x64xf32> to vector<128xf32>
    %23 = vector.shape_cast %22 : vector<128xf32> to vector<128x1xf32>
    %24 = arith.truncf %21 : vector<128x64xf32> to vector<128x64xbf16>
    %c0_11 = arith.constant 0 : index
    %c0_12 = arith.constant 0 : index
    %25 = vector.load %arg10[%c0_11, %c0_12] : memref<64x32xbf16, #tpu.memory_space<vmem>>, vector<64x32xbf16>
    %cst_13 = arith.constant dense<0.000000e+00> : vector<128x32xf32>
    %26 = tpu.matmul %24, %25, %cst_13 {dimension_numbers = #tpu.dot_dimension_numbers<[1], [0], [0], [1], [0, 0, 1, 1], [], []>} : vector<128x64xbf16>, vector<64x32xbf16>, vector<128x32xf32> -> vector<128x32xf32>
    %27 = tpu.reciprocal %23 {approx = true} : vector<128x1xf32> -> vector<128x1xf32>
    %28 = vector.broadcast %27 : vector<128x1xf32> to vector<128x32xf32>
    %29 = arith.mulf %26, %28 : vector<128x32xf32>
    %30 = arith.truncf %29 : vector<128x32xf32> to vector<128x32xbf16>
    %c0_14 = arith.constant 0 : index
    %c0_15 = arith.constant 0 : index
    %31 = vector.load %arg5[%c0_14, %c0_15] : memref<32x64xbf16, #tpu.memory_space<vmem>>, vector<32x64xbf16>
    %cst_16 = arith.constant dense<0.000000e+00> : vector<128x64xf32>
    %32 = tpu.matmul %30, %31, %cst_16 {dimension_numbers = #tpu.dot_dimension_numbers<[1], [0], [0], [1], [0, 0, 1, 1], [], []>} : vector<128x32xbf16>, vector<32x64xbf16>, vector<128x64xf32> -> vector<128x64xf32>
    %c0_17 = arith.constant 0 : index
    %c0_18 = arith.constant 0 : index
    %33 = vector.load %arg8[%c0_17, %c0_18] : memref<1x64xf32, #tpu.memory_space<vmem>>, vector<1x64xf32>
    %34 = vector.broadcast %33 : vector<1x64xf32> to vector<128x64xf32>
    %35 = arith.addf %32, %34 : vector<128x64xf32>
    %36 = arith.addf %7, %35 : vector<128x64xf32>
    %c0_19 = arith.constant 0 : index
    %c0_20 = arith.constant 0 : index
    %c0_21 = arith.constant 0 : index
    %37 = vector.load %arg9[%c0_19, %c0_20, %c0_21] : memref<1x128x64xf32, #tpu.memory_space<vmem>>, vector<1x128x64xf32>
    %38 = vector.shape_cast %37 : vector<1x128x64xf32> to vector<128x64xf32>
    %39 = vector.shape_cast %36 : vector<128x64xf32> to vector<1x128x64xf32>
    tpu.vector_store %arg9[%c0_19, %c0_20, %c0_21], %39 {strides = array<i32>} : memref<1x128x64xf32, #tpu.memory_space<vmem>>, vector<1x128x64xf32>,
    return
  }
  func.func @transform_0(%arg0: i32, %arg1: i32) -> (i32, i32, i32) {
    %c0_i32 = arith.constant 0 : i32
    %c0_i32_0 = arith.constant 0 : i32
    %c0_i32_1 = arith.constant 0 : i32
    return %arg0, %c0_i32, %c0_i32_0 : i32, i32, i32
  }
  func.func @transform_1(%arg0: i32, %arg1: i32) -> (i32, i32) {
    %c0_i32 = arith.constant 0 : i32
    %c0_i32_0 = arith.constant 0 : i32
    %c0_i32_1 = arith.constant 0 : i32
    return %c0_i32, %c0_i32_0 : i32, i32
  }
  func.func @transform_2(%arg0: i32, %arg1: i32) -> (i32, i32) {
    %c0_i32 = arith.constant 0 : i32
    %c0_i32_0 = arith.constant 0 : i32
    %c0_i32_1 = arith.constant 0 : i32
    return %c0_i32, %c0_i32_0 : i32, i32
  }
  func.func @transform_3(%arg0: i32, %arg1: i32) -> (i32, i32) {
    %c0_i32 = arith.constant 0 : i32
    %c0_i32_0 = arith.constant 0 : i32
    %c0_i32_1 = arith.constant 0 : i32
    return %c0_i32, %c0_i32_0 : i32, i32
  }
  func.func @transform_4(%arg0: i32, %arg1: i32) -> (i32, i32) {
    %c0_i32 = arith.constant 0 : i32
    %c0_i32_0 = arith.constant 0 : i32
    %c0_i32_1 = arith.constant 0 : i32
    return %c0_i32, %c0_i32_0 : i32, i32
  }
  func.func @transform_5(%arg0: i32, %arg1: i32) -> (i32, i32) {
    %c0_i32 = arith.constant 0 : i32
    %c0_i32_0 = arith.constant 0 : i32
    %c0_i32_1 = arith.constant 0 : i32
    return %c0_i32, %c0_i32_0 : i32, i32
  }
  func.func @transform_6(%arg0: i32, %arg1: i32) -> (i32, i32) {
    %c0_i32 = arith.constant 0 : i32
    %c0_i32_0 = arith.constant 0 : i32
    %c0_i32_1 = arith.constant 0 : i32
    return %c0_i32, %c0_i32_0 : i32, i32
  }
  func.func @transform_7(%arg0: i32, %arg1: i32) -> (i32, i32, i32) {
    %c0_i32 = arith.constant 0 : i32
    %c0_i32_0 = arith.constant 0 : i32
    return %arg0, %arg1, %c0_i32 : i32, i32, i32
  }
}

</mosaic_0001>

<llo_original>
// kernel: self_attn_forward.1
$region0: #{self_attn_forward.1}
  #allocation0 [shape = 'u32[]', space=smem, size = 0x4, offset = 0x4, fixed_abs, tag = 'smem constant byte address 0x4 - core index']
  #allocation1 [shape = 'u32[144,128]{1,0:T(1,128)}', space=vmem, size = 0x12000, scoped, tag = 'internal scratch']
  #allocation2 [shape = 'bf16[64,32]{1,0:T(16,128)(2,1)}', space=vmem, size = 0x4000, scoped, tag = 'scratch operand']
  #allocation3 [shape = 'bf16[64,8]{1,0:T(16,128)(2,1)}', space=vmem, size = 0x4000, scoped, tag = 'scratch operand']
  %s0 = inlined_call_operand.vmem [shape: f32[2,256,64], index: 0, kind: input, shape index: {}]
  %s1 = inlined_call_operand.vmem [shape: bf16[64,8], index: 1, kind: input, shape index: {}]
  %s2 = inlined_call_operand.vmem [shape: bf16[64,40], index: 2, kind: input, shape index: {}]
  %s3 = inlined_call_operand.vmem [shape: bf16[32,64], index: 3, kind: input, shape index: {}]
  %s4 = inlined_call_operand.vmem [shape: f32[1,8], index: 4, kind: input, shape index: {}]
  %s5 = inlined_call_operand.vmem [shape: f32[1,40], index: 5, kind: input, shape index: {}]
  %s6 = inlined_call_operand.vmem [shape: f32[1,64], index: 6, kind: input, shape index: {}]
  %s7 = inlined_call_operand.vmem [shape: f32[2,256,64], index: 7, kind: output, shape index: {}]
  %s8 = sld [smem:[#allocation0]]
  $region65: #{self_attn_forward.1} parent=0
    _
  %s10 = ssub.s32 1, %s8
  %s11 = scalar_select 0, %s10, %s8
  loop: start=0, step=1, limit=6
  $region2: #{self_attn_forward.1} parent=0 // loop_pre_header
    _
  $region3: #{self_attn_forward.1} parent=0 // loop_header
    %s13 = sphi 0, %s17
    %p14 = scmp.ge.s32.totalorder %s13, 6
    %s20 = sphi 0, %s32
    %s21 = sphi 0, %s28
    %s22 = sphi 0, %s20
    %s23 = sphi 0, %s21
    %s24 = sphi 0, %s22
    %s25 = sphi 0, %s23
    %s35 = sphi 0, %s37
    %s38 = sphi 0, %s35
    %s39 = sphi 0, %s38
    %s55 = sphi 0, %s39
    %s59 = sphi 0, %s59
    %s61 = sphi 0, %s59
    %s62 = sphi 0, %s61
    %s76 = sphi 0, %s62
    %s80 = sphi 0, %s80
    %s82 = sphi 0, %s80
    %s83 = sphi 0, %s82
    %s97 = sphi 0, %s83
    %s101 = sphi 0, %s101
    %s103 = sphi 0, %s101
    %s104 = sphi 0, %s103
    %s118 = sphi 0, %s104
    %s122 = sphi 0, %s122
    %s124 = sphi 0, %s122
    %s125 = sphi 0, %s124
    %s139 = sphi 0, %s125
    %s143 = sphi 0, %s143
    %s145 = sphi 0, %s143
    %s146 = sphi 0, %s145
    %s160 = sphi 0, %s146
    %s164 = sphi 0, %s164
    %s166 = sphi 0, %s164
    %s167 = sphi 0, %s166
    %s181 = sphi 0, %s167
    %s189 = sphi 0, %s191
    %s192 = sphi 0, %s189
    %s193 = sphi 0, %s192
    %s209 = sphi 0, %s193
  $region4: #{self_attn_forward.1} parent=0 // loop_header_branch
    %16 = sbr.rel (%p14) target = $region8
  $region5: #{self_attn_forward.1} parent=0 // loop_body
    %s18 = ssub.s32 %s13, 1
    %s19 = ssub.s32 %s13, 2
    %s26 = sadd.s32 1, %s21
    %p27 = scmp.ge.s32.totalorder %s26, 2
    %s28 = scalar_select %p27, 0, %s26
    %s29 = sadd.s32 1, %s20
    %s30 = scalar_select %p27, %s29, %s20
    %p31 = scmp.ge.s32.totalorder %s30, 2
    %s32 = scalar_select %p31, 0, %s30
    %s33 = ssub.s32 %s20, %s32
    %p34 = scmp.eq.s32.totalorder %s33, 0
    %s36 = sadd.s32 %s35, 1
    %s37 = scalar_select %p34, %s35, %s36
    %p40 = pneg %p34
    %p41 = scmp.eq.s32.totalorder %s13, 3
    %p42 = por %p40, %p41
    %p43 = scmp.ne.s32.totalorder %s35, %s38
    %p44 = scmp.eq.s32.totalorder %s13, 0
    %p45 = por %p43, %p44
    %p46 = scmp.ne.s32.totalorder %s35, %s38
    %p47 = scmp.eq.s32.totalorder %s18, 3
    %p48 = por %p46, %p47
    %p49 = scmp.ne.s32.totalorder %s38, %s39
    %p50 = scmp.eq.s32.totalorder %s18, 0
    %p51 = por %p49, %p50
    %p52 = scmp.ne.s32.totalorder %s38, %s39
    %p53 = scmp.eq.s32.totalorder %s19, 3
    %p54 = por %p52, %p53
    %p56 = scmp.ne.s32.totalorder %s39, %s55
    %p57 = scmp.eq.s32.totalorder %s19, 0
    %p58 = por %p56, %p57
    %s60 = sadd.s32 %s59, 1
    %p63 = scmp.eq.s32.totalorder %s13, 3
    %p64 = scmp.ne.s32.totalorder %s59, %s61
    %p65 = scmp.eq.s32.totalorder %s13, 0
    %p66 = por %p64, %p65
    %p67 = scmp.ne.s32.totalorder %s59, %s61
    %p68 = scmp.eq.s32.totalorder %s18, 3
    %p69 = por %p67, %p68
    %p70 = scmp.ne.s32.totalorder %s61, %s62
    %p71 = scmp.eq.s32.totalorder %s18, 0
    %p72 = por %p70, %p71
    %p73 = scmp.ne.s32.totalorder %s61, %s62
    %p74 = scmp.eq.s32.totalorder %s19, 3
    %p75 = por %p73, %p74
    %p77 = scmp.ne.s32.totalorder %s62, %s76
    %p78 = scmp.eq.s32.totalorder %s19, 0
    %p79 = por %p77, %p78
    %s81 = sadd.s32 %s80, 1
    %p84 = scmp.eq.s32.totalorder %s13, 3
    %p85 = scmp.ne.s32.totalorder %s80, %s82
    %p86 = scmp.eq.s32.totalorder %s13, 0
    %p87 = por %p85, %p86
    %p88 = scmp.ne.s32.totalorder %s80, %s82
    %p89 = scmp.eq.s32.totalorder %s18, 3
    %p90 = por %p88, %p89
    %p91 = scmp.ne.s32.totalorder %s82, %s83
    %p92 = scmp.eq.s32.totalorder %s18, 0
    %p93 = por %p91, %p92
    %p94 = scmp.ne.s32.totalorder %s82, %s83
    %p95 = scmp.eq.s32.totalorder %s19, 3
    %p96 = por %p94, %p95
    %p98 = scmp.ne.s32.totalorder %s83, %s97
    %p99 = scmp.eq.s32.totalorder %s19, 0
    %p100 = por %p98, %p99
    %s102 = sadd.s32 %s101, 1
    %p105 = scmp.eq.s32.totalorder %s13, 3
    %p106 = scmp.ne.s32.totalorder %s101, %s103
    %p107 = scmp.eq.s32.totalorder %s13, 0
    %p108 = por %p106, %p107
    %p109 = scmp.ne.s32.totalorder %s101, %s103
    %p110 = scmp.eq.s32.totalorder %s18, 3
    %p111 = por %p109, %p110
    %p112 = scmp.ne.s32.totalorder %s103, %s104
    %p113 = scmp.eq.s32.totalorder %s18, 0
    %p114 = por %p112, %p113
    %p115 = scmp.ne.s32.totalorder %s103, %s104
    %p116 = scmp.eq.s32.totalorder %s19, 3
    %p117 = por %p115, %p116
    %p119 = scmp.ne.s32.totalorder %s104, %s118
    %p120 = scmp.eq.s32.totalorder %s19, 0
    %p121 = por %p119, %p120
    %s123 = sadd.s32 %s122, 1
    %p126 = scmp.eq.s32.totalorder %s13, 3
    %p127 = scmp.ne.s32.totalorder %s122, %s124
    %p128 = scmp.eq.s32.totalorder %s13, 0
    %p129 = por %p127, %p128
    %p130 = scmp.ne.s32.totalorder %s122, %s124
    %p131 = scmp.eq.s32.totalorder %s18, 3
    %p132 = por %p130, %p131
    %p133 = scmp.ne.s32.totalorder %s124, %s125
    %p134 = scmp.eq.s32.totalorder %s18, 0
    %p135 = por %p133, %p134
    %p136 = scmp.ne.s32.totalorder %s124, %s125
    %p137 = scmp.eq.s32.totalorder %s19, 3
    %p138 = por %p136, %p137
    %p140 = scmp.ne.s32.totalorder %s125, %s139
    %p141 = scmp.eq.s32.totalorder %s19, 0
    %p142 = por %p140, %p141
    %s144 = sadd.s32 %s143, 1
    %p147 = scmp.eq.s32.totalorder %s13, 3
    %p148 = scmp.ne.s32.totalorder %s143, %s145
    %p149 = scmp.eq.s32.totalorder %s13, 0
    %p150 = por %p148, %p149
    %p151 = scmp.ne.s32.totalorder %s143, %s145
    %p152 = scmp.eq.s32.totalorder %s18, 3
    %p153 = por %p151, %p152
    %p154 = scmp.ne.s32.totalorder %s145, %s146
    %p155 = scmp.eq.s32.totalorder %s18, 0
    %p156 = por %p154, %p155
    %p157 = scmp.ne.s32.totalorder %s145, %s146
    %p158 = scmp.eq.s32.totalorder %s19, 3
    %p159 = por %p157, %p158
    %p161 = scmp.ne.s32.totalorder %s146, %s160
    %p162 = scmp.eq.s32.totalorder %s19, 0
    %p163 = por %p161, %p162
    %s165 = sadd.s32 %s164, 1
    %p168 = scmp.eq.s32.totalorder %s13, 3
    %p169 = scmp.ne.s32.totalorder %s164, %s166
    %p170 = scmp.eq.s32.totalorder %s13, 0
    %p171 = por %p169, %p170
    %p172 = scmp.ne.s32.totalorder %s164, %s166
    %p173 = scmp.eq.s32.totalorder %s18, 3
    %p174 = por %p172, %p173
    %p175 = scmp.ne.s32.totalorder %s166, %s167
    %p176 = scmp.eq.s32.totalorder %s18, 0
    %p177 = por %p175, %p176
    %p178 = scmp.ne.s32.totalorder %s166, %s167
    %p179 = scmp.eq.s32.totalorder %s19, 3
    %p180 = por %p178, %p179
    %p182 = scmp.ne.s32.totalorder %s167, %s181
    %p183 = scmp.eq.s32.totalorder %s19, 0
    %p184 = por %p182, %p183
    %s185 = ssub.s32 %s20, %s32
    %s186 = ssub.s32 %s21, %s28
    %s187 = sor.u32 %s185, %s186
    %p188 = scmp.eq.s32.totalorder %s187, 0
    %s190 = sadd.s32 %s189, 1
    %s191 = scalar_select %p188, %s189, %s190
    %p194 = pneg %p188
    %p195 = scmp.eq.s32.totalorder %s13, 3
    %p196 = por %p194, %p195
    %p197 = scmp.ne.s32.totalorder %s189, %s192
    %p198 = scmp.eq.s32.totalorder %s13, 0
    %p199 = por %p197, %p198
    %p200 = scmp.ne.s32.totalorder %s189, %s192
    %p201 = scmp.eq.s32.totalorder %s18, 3
    %p202 = por %p200, %p201
    %p203 = scmp.ne.s32.totalorder %s192, %s193
    %p204 = scmp.eq.s32.totalorder %s18, 0
    %p205 = por %p203, %p204
    %p206 = scmp.ne.s32.totalorder %s192, %s193
    %p207 = scmp.eq.s32.totalorder %s19, 3
    %p208 = por %p206, %p207
    %p210 = scmp.ne.s32.totalorder %s193, %s209
    %p211 = scmp.eq.s32.totalorder %s19, 0
    %p212 = por %p210, %p211
    %p213 = scmp.le.s32.totalorder 1, %s13
    %p214 = scmp.lt.s32.totalorder %s13, 5
    %p215 = pnand %p213, %p214
    %p216 = pneg %p215
    // Predicated region
    $region9: #{self_attn_forward.1} parent=5 // pred_check
      _
    $region10: #{self_attn_forward.1} parent=5 // pred_check_branch
      %218 = sbr.rel (%p215) target = $region12
    $region11: #{self_attn_forward.1} parent=5 // pred_region
      %s219 = ssub.s32 %s13, 1
      // Predicated region
      $region13: #{self_attn_forward.1} parent=11 // pred_check
        %p220 = pneg %p72
      $region14: #{self_attn_forward.1} parent=11 // pred_check_branch
        %222 = sbr.rel (%p220) target = $region16
      $region15: #{self_attn_forward.1} parent=11 // pred_region
        _
      $region16: #{self_attn_forward.1} parent=11 // pred_fallthru
        _
      // Predicated region
      $region17: #{self_attn_forward.1} parent=11 // pred_check
        %p223 = pneg %p93
      $region18: #{self_attn_forward.1} parent=11 // pred_check_branch
        %225 = sbr.rel (%p223) target = $region20
      $region19: #{self_attn_forward.1} parent=11 // pred_region
        _
      $region20: #{self_attn_forward.1} parent=11 // pred_fallthru
        _
      // Predicated region
      $region21: #{self_attn_forward.1} parent=11 // pred_check
        %p226 = pneg %p114
      $region22: #{self_attn_forward.1} parent=11 // pred_check_branch
        %228 = sbr.rel (%p226) target = $region24
      $region23: #{self_attn_forward.1} parent=11 // pred_region
        _
      $region24: #{self_attn_forward.1} parent=11 // pred_fallthru
        _
      // Predicated region
      $region25: #{self_attn_forward.1} parent=11 // pred_check
        %p229 = pneg %p135
      $region26: #{self_attn_forward.1} parent=11 // pred_check_branch
        %231 = sbr.rel (%p229) target = $region28
      $region27: #{self_attn_forward.1} parent=11 // pred_region
        _
      $region28: #{self_attn_forward.1} parent=11 // pred_fallthru
        _
      // Predicated region
      $region29: #{self_attn_forward.1} parent=11 // pred_check
        %p232 = pneg %p156
      $region30: #{self_attn_forward.1} parent=11 // pred_check_branch
        %234 = sbr.rel (%p232) target = $region32
      $region31: #{self_attn_forward.1} parent=11 // pred_region
        _
      $region32: #{self_attn_forward.1} parent=11 // pred_fallthru
        _
      // Predicated region
      $region33: #{self_attn_forward.1} parent=11 // pred_check
        %p235 = pneg %p177
      $region34: #{self_attn_forward.1} parent=11 // pred_check_branch
        %237 = sbr.rel (%p235) target = $region36
      $region35: #{self_attn_forward.1} parent=11 // pred_region
        _
      $region36: #{self_attn_forward.1} parent=11 // pred_fallthru
        _
    $region12: #{self_attn_forward.1} parent=5 // pred_fallthru
      _
    %p238 = scmp.lt.s32.totalorder %s13, 4
    // Predicated region
    $region37: #{self_attn_forward.1} parent=5 // pred_check
      %p239 = pneg %p238
    $region38: #{self_attn_forward.1} parent=5 // pred_check_branch
      %241 = sbr.rel (%p239) target = $region40
    $region39: #{self_attn_forward.1} parent=5 // pred_region
      // Predicated region
      $region41: #{self_attn_forward.1} parent=39 // pred_check
        %p242 = pneg %p45
      $region42: #{self_attn_forward.1} parent=39 // pred_check_branch
        %244 = sbr.rel (%p242) target = $region44
      $region43: #{self_attn_forward.1} parent=39 // pred_region
        %p245 = scmp.lt.s32.totalorder %s20, 1
        %s246 = scalar_select %p245, %s20, 1
        %s247 = smul.addr %s246, 32
        %s248 = smul.addr %s247, 8
        %s249 = scalar_lea.vmem %s0, %s248
      $region44: #{self_attn_forward.1} parent=39 // pred_fallthru
        _
    $region40: #{self_attn_forward.1} parent=5 // pred_fallthru
      _
    %p250 = scmp.le.s32.totalorder 1, %s13
    %p251 = scmp.lt.s32.totalorder %s13, 5
    %p252 = pnand %p250, %p251
    %p253 = pneg %p252
    // Predicated region
    $region45: #{self_attn_forward.1} parent=5 // pred_check
      _
    $region46: #{self_attn_forward.1} parent=5 // pred_check_branch
      %255 = sbr.rel (%p252) target = $region48
    $region47: #{self_attn_forward.1} parent=5 // pred_region
      %s256 = ssub.s32 %s13, 1
      %p257 = scmp.lt.s32.totalorder %s22, 1
      %s258 = scalar_select %p257, %s22, 1
      %s259 = smul.addr %s258, 32
      %s260 = smul.addr %s259, 8
      %s261 = scalar_lea.vmem %s0, %s260
      %p262 = pneg %p51
      %p263 = pneg %p48
      %p264 = pneg %p72
      %p265 = pneg %p69
      %p266 = pneg %p93
      %p267 = pneg %p90
      %p268 = pneg %p114
      %p269 = pneg %p111
      %p270 = pneg %p135
      %p271 = pneg %p132
      %p272 = pneg %p156
      %p273 = pneg %p153
      %p274 = pneg %p177
      %p275 = pneg %p174
      %p276 = pneg %p205
      %p277 = pneg %p202
      %s278 = smul.u32 16, %s23
      %p279 = scmp.lt.s32.totalorder %s22, 1
      %s280 = scalar_select %p279, %s22, 1
      %p281 = scmp.lt.s32.totalorder %s278, 31
      %s282 = scalar_select %p281, %s278, 31
      %s283 = smul.addr %s280, 32
      %s284 = sadd.s32 %s282, %s283
      %s285 = smul.addr %s284, 8
      %s286 = scalar_lea.vmem %s7, %s285
      %p287 = scmp.lt.s32.totalorder %s22, 1
      %s288 = scalar_select %p287, %s22, 1
      %s289 = smul.addr %s288, 32
      %s290 = smul.addr %s289, 8
      %s291 = scalar_lea.vmem %s0, %s290
      %s292 = smul.u32 16, %s23
      %p293 = scmp.lt.s32.totalorder %s22, 1
      %s294 = scalar_select %p293, %s22, 1
      %p295 = scmp.lt.s32.totalorder %s292, 31
      %s296 = scalar_select %p295, %s292, 31
      %s297 = smul.addr %s294, 32
      %s298 = sadd.s32 %s296, %s297
      %s299 = smul.addr %s298, 8
      %s300 = scalar_lea.vmem %s7, %s299
      %s301 = smul.u32 16, %s23
      %p303 = scmp.eq.s32.totalorder %s23, 0
      // Predicated region
      $region49: #{self_attn_forward.1} parent=47 // pred_check
        %p304 = pneg %p303
      $region50: #{self_attn_forward.1} parent=47 // pred_check_branch
        %306 = sbr.rel (%p304) target = $region52
      $region51: #{self_attn_forward.1} parent=47 // pred_region
        %v307 = vld [vmem:[%s291] sm:$0xff]
        %v308 = vld [vmem:[%s291 + $0x8] sm:$0xff]
        %v309 = vld [vmem:[%s291 + $0x10] sm:$0xff]
        %v310 = vld [vmem:[%s291 + $0x18] sm:$0xff]
        %v311 = vld [vmem:[%s291 + $0x20] sm:$0xff]
        %v312 = vld [vmem:[%s291 + $0x28] sm:$0xff]
        %v313 = vld [vmem:[%s291 + $0x30] sm:$0xff]
        %v314 = vld [vmem:[%s291 + $0x38] sm:$0xff]
        %v315 = vld [vmem:[%s291 + $0x40] sm:$0xff]
        %v316 = vld [vmem:[%s291 + $0x48] sm:$0xff]
        %v317 = vld [vmem:[%s291 + $0x50] sm:$0xff]
        %v318 = vld [vmem:[%s291 + $0x58] sm:$0xff]
        %v319 = vld [vmem:[%s291 + $0x60] sm:$0xff]
        %v320 = vld [vmem:[%s291 + $0x68] sm:$0xff]
        %v321 = vld [vmem:[%s291 + $0x70] sm:$0xff]
        %v322 = vld [vmem:[%s291 + $0x78] sm:$0xff]
        %v323 = vld [vmem:[%s291 + $0x80] sm:$0xff]
        %v324 = vld [vmem:[%s291 + $0x88] sm:$0xff]
        %v325 = vld [vmem:[%s291 + $0x90] sm:$0xff]
        %v326 = vld [vmem:[%s291 + $0x98] sm:$0xff]
        %v327 = vld [vmem:[%s291 + $0xa0] sm:$0xff]
        %v328 = vld [vmem:[%s291 + $0xa8] sm:$0xff]
        %v329 = vld [vmem:[%s291 + $0xb0] sm:$0xff]
        %v330 = vld [vmem:[%s291 + $0xb8] sm:$0xff]
        %v331 = vld [vmem:[%s291 + $0xc0] sm:$0xff]
        %v332 = vld [vmem:[%s291 + $0xc8] sm:$0xff]
        %v333 = vld [vmem:[%s291 + $0xd0] sm:$0xff]
        %v334 = vld [vmem:[%s291 + $0xd8] sm:$0xff]
        %v335 = vld [vmem:[%s291 + $0xe0] sm:$0xff]
        %v336 = vld [vmem:[%s291 + $0xe8] sm:$0xff]
        %v337 = vld [vmem:[%s291 + $0xf0] sm:$0xff]
        %v338 = vld [vmem:[%s291 + $0xf8] sm:$0xff]
        %v339 = vpack.c.bf16 %v308, %v307
        %v340 = vpack.c.bf16 %v310, %v309
        %v341 = vpack.c.bf16 %v312, %v311
        %v342 = vpack.c.bf16 %v314, %v313
        %v343 = vpack.c.bf16 %v316, %v315
        %v344 = vpack.c.bf16 %v318, %v317
        %v345 = vpack.c.bf16 %v320, %v319
        %v346 = vpack.c.bf16 %v322, %v321
        %v347 = vpack.c.bf16 %v324, %v323
        %v348 = vpack.c.bf16 %v326, %v325
        %v349 = vpack.c.bf16 %v328, %v327
        %v350 = vpack.c.bf16 %v330, %v329
        %v351 = vpack.c.bf16 %v332, %v331
        %v352 = vpack.c.bf16 %v334, %v333
        %v353 = vpack.c.bf16 %v336, %v335
        %v354 = vpack.c.bf16 %v338, %v337
        %v355 = vld [vmem:[%s2] sm:$0xf]
        %v356 = vld [vmem:[%s2 + $0x4] sm:$0xf]
        %v357 = vld [vmem:[%s2 + $0x8] sm:$0xf]
        %v358 = vld [vmem:[%s2 + $0xc] sm:$0xf]
        %v359 = vld [vmem:[%s2 + $0x10] sm:$0xf]
        %v360 = vld [vmem:[%s2 + $0x14] sm:$0xf]
        %v361 = vld [vmem:[%s2 + $0x18] sm:$0xf]
        %v362 = vld [vmem:[%s2 + $0x1c] sm:$0xf]
        %v363 = vld [vmem:[%s5] sm:$0x1]
        %v365 = vlaneseq
        %v366 = vshrl.u32 %v365, 7
        %v367 = vsub.s32 0, %v366
        %v368 = vrot.slane %v363, %v367
        %v378 = vunpack.c.l.b16 %v355
        %v379 = vunpack.c.l.b16 %v356
        %v380 = vunpack.c.l.b16 %v357
        %v381 = vunpack.c.l.b16 %v358
        %v382 = vunpack.c.l.b16 %v359
        %v383 = vunpack.c.l.b16 %v360
        %v384 = vunpack.c.l.b16 %v361
        %v385 = vunpack.c.l.b16 %v362
        %v386 = vpack.c.b16 %v379, %v378
        %v387 = vpack.c.b16 %v381, %v380
        %v388 = vpack.c.b16 %v383, %v382
        %v389 = vpack.c.b16 %v385, %v384
        %vm394 = vcmask 523264
        %v396 = vsel %vm394, %v339, 0
        %v399 = vsel %vm394, %v340, 0
        %v402 = vsel %vm394, %v341, 0
        %v405 = vsel %vm394, %v342, 0
        %v408 = vsel %vm394, %v343, 0
        %v411 = vsel %vm394, %v344, 0
        %v414 = vsel %vm394, %v345, 0
        %v417 = vsel %vm394, %v346, 0
        %v420 = vsel %vm394, %v347, 0
        %v423 = vsel %vm394, %v348, 0
        %v426 = vsel %vm394, %v349, 0
        %v429 = vsel %vm394, %v350, 0
        %v432 = vsel %vm394, %v351, 0
        %v435 = vsel %vm394, %v352, 0
        %v438 = vsel %vm394, %v353, 0
        %v441 = vsel %vm394, %v354, 0
        %443 = vmatprep.subr.bf16.mxu0 0
        %444 = vmatpush1.bf16.msra.mxu0 %v386
        %445 = vmatprep.subr.bf16.mxu0 0
        %446 = vmatpush1.bf16.msra.mxu0 %v387
        %447 = vmatprep.subr.bf16.mxu0 0
        %448 = vmatpush1.bf16.msra.mxu0 %v388
        %449 = vmatprep.subr.bf16.mxu0 0
        %450 = vmatpush1.bf16.msra.mxu0 %v389
        %451 = vmatprep.subr.bf16.mxu0 0
        %452 = vmatpush1.bf16.msra.mxu0 0
        %453 = vmatprep.subr.bf16.mxu0 0
        %454 = vmatpush1.bf16.msra.mxu0 0
        %455 = vmatprep.subr.bf16.mxu0 0
        %456 = vmatpush1.bf16.msra.mxu0 0
        %457 = vmatprep.subr.bf16.mxu0 0
        %458 = vmatpush1.bf16.msra.mxu0 0
        %459 = vmatprep.subr.bf16.mxu0 0
        %460 = vmatpush1.bf16.msra.mxu0 0
        %461 = vmatprep.subr.bf16.mxu0 0
        %462 = vmatpush1.bf16.msra.mxu0 0
        %463 = vmatprep.subr.bf16.mxu0 0
        %464 = vmatpush1.bf16.msra.mxu0 0
        %465 = vmatprep.subr.bf16.mxu0 0
        %466 = vmatpush1.bf16.msra.mxu0 0
        %467 = vmatprep.subr.bf16.mxu0 0
        %468 = vmatpush1.bf16.msra.mxu0 0
        %469 = vmatprep.subr.bf16.mxu0 0
        %470 = vmatpush1.bf16.msra.mxu0 0
        %471 = vmatprep.subr.bf16.mxu0 0
        %472 = vmatpush1.bf16.msra.mxu0 0
        %473 = vmatprep.subr.bf16.mxu0 0
        %474 = vmatpush1.bf16.msra.mxu0 0
        %475 = vmatprep.mubr.bf16.mxu0 0
        %476 = vmatmul.mubr.bf16.gmra.mrb[0].mxu0 %v396
        %v477 = vpop.f32.mrb[0].mxu0
        %v478 = vadd.f32 %v368, %v477
        %v479 = vpop.f32.mrb[0].mxu0
        %v480 = vpop.f32.mrb[0].mxu0
        %v481 = vadd.f32 %v368, %v480
        %v482 = vpop.f32.mrb[0].mxu0
        %483 = vmatprep.mubr.bf16.mxu0 0
        %484 = vmatmul.mubr.bf16.gmra.mrb[0].mxu0 %v399
        %v485 = vpop.f32.mrb[0].mxu0
        %v486 = vadd.f32 %v368, %v485
        %v487 = vpop.f32.mrb[0].mxu0
        %v488 = vpop.f32.mrb[0].mxu0
        %v489 = vadd.f32 %v368, %v488
        %v490 = vpop.f32.mrb[0].mxu0
        %491 = vmatprep.mubr.bf16.mxu0 0
        %492 = vmatmul.mubr.bf16.gmra.mrb[0].mxu0 %v402
        %v493 = vpop.f32.mrb[0].mxu0
        %v494 = vadd.f32 %v368, %v493
        %v495 = vpop.f32.mrb[0].mxu0
        %v496 = vpop.f32.mrb[0].mxu0
        %v497 = vadd.f32 %v368, %v496
        %v498 = vpop.f32.mrb[0].mxu0
        %499 = vmatprep.mubr.bf16.mxu0 0
        %500 = vmatmul.mubr.bf16.gmra.mrb[0].mxu0 %v405
        %v501 = vpop.f32.mrb[0].mxu0
        %v502 = vadd.f32 %v368, %v501
        %v503 = vpop.f32.mrb[0].mxu0
        %v504 = vpop.f32.mrb[0].mxu0
        %v505 = vadd.f32 %v368, %v504
        %v506 = vpop.f32.mrb[0].mxu0
        %507 = vmatprep.mubr.bf16.mxu0 0
        %508 = vmatmul.mubr.bf16.gmra.mrb[0].mxu0 %v408
        %v509 = vpop.f32.mrb[0].mxu0
        %v510 = vadd.f32 %v368, %v509
        %v511 = vpop.f32.mrb[0].mxu0
        %v512 = vpop.f32.mrb[0].mxu0
        %v513 = vadd.f32 %v368, %v512
        %v514 = vpop.f32.mrb[0].mxu0
        %515 = vmatprep.mubr.bf16.mxu0 0
        %516 = vmatmul.mubr.bf16.gmra.mrb[0].mxu0 %v411
        %v517 = vpop.f32.mrb[0].mxu0
        %v518 = vadd.f32 %v368, %v517
        %v519 = vpop.f32.mrb[0].mxu0
        %v520 = vpop.f32.mrb[0].mxu0
        %v521 = vadd.f32 %v368, %v520
        %v522 = vpop.f32.mrb[0].mxu0
        %523 = vmatprep.mubr.bf16.mxu0 0
        %524 = vmatmul.mubr.bf16.gmra.mrb[0].mxu0 %v414
        %v525 = vpop.f32.mrb[0].mxu0
        %v526 = vadd.f32 %v368, %v525
        %v527 = vpop.f32.mrb[0].mxu0
        %v528 = vpop.f32.mrb[0].mxu0
        %v529 = vadd.f32 %v368, %v528
        %v530 = vpop.f32.mrb[0].mxu0
        %531 = vmatprep.mubr.bf16.mxu0 0
        %532 = vmatmul.mubr.bf16.gmra.mrb[0].mxu0 %v417
        %v533 = vpop.f32.mrb[0].mxu0
        %v534 = vadd.f32 %v368, %v533
        %v535 = vpop.f32.mrb[0].mxu0
        %v536 = vpop.f32.mrb[0].mxu0
        %v537 = vadd.f32 %v368, %v536
        %v538 = vpop.f32.mrb[0].mxu0
        %539 = vmatprep.mubr.bf16.mxu0 0
        %540 = vmatmul.mubr.bf16.gmra.mrb[0].mxu0 %v420
        %v541 = vpop.f32.mrb[0].mxu0
        %v542 = vadd.f32 %v368, %v541
        %v543 = vpop.f32.mrb[0].mxu0
        %v544 = vpop.f32.mrb[0].mxu0
        %v545 = vadd.f32 %v368, %v544
        %v546 = vpop.f32.mrb[0].mxu0
        %547 = vmatprep.mubr.bf16.mxu0 0
        %548 = vmatmul.mubr.bf16.gmra.mrb[0].mxu0 %v423
        %v549 = vpop.f32.mrb[0].mxu0
        %v550 = vadd.f32 %v368, %v549
        %v551 = vpop.f32.mrb[0].mxu0
        %v552 = vpop.f32.mrb[0].mxu0
        %v553 = vadd.f32 %v368, %v552
        %v554 = vpop.f32.mrb[0].mxu0
        %555 = vmatprep.mubr.bf16.mxu0 0
        %556 = vmatmul.mubr.bf16.gmra.mrb[0].mxu0 %v426
        %v557 = vpop.f32.mrb[0].mxu0
        %v558 = vadd.f32 %v368, %v557
        %v559 = vpop.f32.mrb[0].mxu0
        %v560 = vpop.f32.mrb[0].mxu0
        %v561 = vadd.f32 %v368, %v560
        %v562 = vpop.f32.mrb[0].mxu0
        %563 = vmatprep.mubr.bf16.mxu0 0
        %564 = vmatmul.mubr.bf16.gmra.mrb[0].mxu0 %v429
        %v565 = vpop.f32.mrb[0].mxu0
        %v566 = vadd.f32 %v368, %v565
        %v567 = vpop.f32.mrb[0].mxu0
        %v568 = vpop.f32.mrb[0].mxu0
        %v569 = vadd.f32 %v368, %v568
        %v570 = vpop.f32.mrb[0].mxu0
        %571 = vmatprep.mubr.bf16.mxu0 0
        %572 = vmatmul.mubr.bf16.gmra.mrb[0].mxu0 %v432
        %v573 = vpop.f32.mrb[0].mxu0
        %v574 = vadd.f32 %v368, %v573
        %v575 = vpop.f32.mrb[0].mxu0
        %v576 = vpop.f32.mrb[0].mxu0
        %v577 = vadd.f32 %v368, %v576
        %v578 = vpop.f32.mrb[0].mxu0
        %579 = vmatprep.mubr.bf16.mxu0 0
        %580 = vmatmul.mubr.bf16.gmra.mrb[0].mxu0 %v435
        %v581 = vpop.f32.mrb[0].mxu0
        %v582 = vadd.f32 %v368, %v581
        %v583 = vpop.f32.mrb[0].mxu0
        %v584 = vpop.f32.mrb[0].mxu0
        %v585 = vadd.f32 %v368, %v584
        %v586 = vpop.f32.mrb[0].mxu0
        %587 = vmatprep.mubr.bf16.mxu0 0
        %588 = vmatmul.mubr.bf16.gmra.mrb[0].mxu0 %v438
        %v589 = vpop.f32.mrb[0].mxu0
        %v590 = vadd.f32 %v368, %v589
        %v591 = vpop.f32.mrb[0].mxu0
        %v592 = vpop.f32.mrb[0].mxu0
        %v593 = vadd.f32 %v368, %v592
        %v594 = vpop.f32.mrb[0].mxu0
        %595 = vmatprep.mubr.bf16.mxu0 0
        %596 = vmatmul.mubr.bf16.gmra.mrb[0].mxu0 %v441
        %v597 = vpop.f32.mrb[0].mxu0
        %v598 = vadd.f32 %v368, %v597
        %v599 = vpop.f32.mrb[0].mxu0
        %v600 = vpop.f32.mrb[0].mxu0
        %v601 = vadd.f32 %v368, %v600
        %v602 = vpop.f32.mrb[0].mxu0
        %603 = vdwg.mxu0
        %v604 = vmax.f32 %v478, %v510
        %v605 = vmax.f32 %v481, %v513
        %v606 = vmax.f32 %v486, %v518
        %v607 = vmax.f32 %v489, %v521
        %v608 = vmax.f32 %v494, %v526
        %v609 = vmax.f32 %v497, %v529
        %v610 = vmax.f32 %v502, %v534
        %v611 = vmax.f32 %v505, %v537
        %v612 = vmax.f32 %v542, %v574
        %v613 = vmax.f32 %v545, %v577
        %v614 = vmax.f32 %v550, %v582
        %v615 = vmax.f32 %v553, %v585
        %v616 = vmax.f32 %v558, %v590
        %v617 = vmax.f32 %v561, %v593
        %v618 = vmax.f32 %v566, %v598
        %v619 = vmax.f32 %v569, %v601
        %v620 = vmax.f32 %v604, %v612
        %v621 = vmax.f32 %v605, %v613
        %v622 = vmax.f32 %v606, %v614
        %v623 = vmax.f32 %v607, %v615
        %v624 = vmax.f32 %v608, %v616
        %v625 = vmax.f32 %v609, %v617
        %v626 = vmax.f32 %v610, %v618
        %v627 = vmax.f32 %v611, %v619
        %v628 = vpack.c.bf16 %v621, %v620
        %v629 = vpack.c.bf16 %v623, %v622
        %v630 = vpack.c.bf16 %v625, %v624
        %v631 = vpack.c.bf16 %v627, %v626
        %vm632 = vcmask 261120
        %633 = vst.msk [vmem:[#allocation2] sm:$0xff] %vm632, %v628
        %634 = vst.msk [vmem:[#allocation2 + $0x8] sm:$0xff] %vm632, %v629
        %635 = vst.msk [vmem:[#allocation2 + $0x10] sm:$0xff] %vm632, %v630
        %636 = vst.msk [vmem:[#allocation2 + $0x18] sm:$0xff] %vm632, %v631
        %641 = vrot.lane.b32.xlu0 %v628, 96
        %v642 = vpop.permute.xlu0 %641
        %643 = vrot.lane.b32.xlu0 %v629, 96
        %v644 = vpop.permute.xlu0 %643
        %645 = vrot.lane.b32.xlu0 %v630, 96
        %v646 = vpop.permute.xlu0 %645
        %647 = vrot.lane.b32.xlu0 %v631, 96
        %v648 = vpop.permute.xlu0 %647
        %vm653 = vcmask 64512
        %654 = vst.msk [vmem:[#allocation3] sm:$0xff] %vm653, %v642
        %655 = vst.msk [vmem:[#allocation3 + $0x8] sm:$0xff] %vm653, %v644
        %656 = vst.msk [vmem:[#allocation3 + $0x10] sm:$0xff] %vm653, %v646
        %657 = vst.msk [vmem:[#allocation3 + $0x18] sm:$0xff] %vm653, %v648
      $region52: #{self_attn_forward.1} parent=47 // pred_fallthru
        _
      %s658 = smul.u32 %s23, 128
      %s659 = scalar_lea.vmem %s291, %s658
      %v660 = vld [vmem:[%s659] sm:$0xff]
      %v661 = vld [vmem:[%s659 + $0x8] sm:$0xff]
      %v662 = vld [vmem:[%s659 + $0x10] sm:$0xff]
      %v663 = vld [vmem:[%s659 + $0x18] sm:$0xff]
      %v664 = vld [vmem:[%s659 + $0x20] sm:$0xff]
      %v665 = vld [vmem:[%s659 + $0x28] sm:$0xff]
      %v666 = vld [vmem:[%s659 + $0x30] sm:$0xff]
      %v667 = vld [vmem:[%s659 + $0x38] sm:$0xff]
      %v668 = vld [vmem:[%s659 + $0x40] sm:$0xff]
      %v669 = vld [vmem:[%s659 + $0x48] sm:$0xff]
      %v670 = vld [vmem:[%s659 + $0x50] sm:$0xff]
      %v671 = vld [vmem:[%s659 + $0x58] sm:$0xff]
      %v672 = vld [vmem:[%s659 + $0x60] sm:$0xff]
      %v673 = vld [vmem:[%s659 + $0x68] sm:$0xff]
      %v674 = vld [vmem:[%s659 + $0x70] sm:$0xff]
      %v675 = vld [vmem:[%s659 + $0x78] sm:$0xff]
      %v676 = vpack.c.bf16 %v661, %v660
      %v677 = vpack.c.bf16 %v663, %v662
      %v678 = vpack.c.bf16 %v665, %v664
      %v679 = vpack.c.bf16 %v667, %v666
      %v680 = vpack.c.bf16 %v669, %v668
      %v681 = vpack.c.bf16 %v671, %v670
      %v682 = vpack.c.bf16 %v673, %v672
      %v683 = vpack.c.bf16 %v675, %v674
      %v684 = vld [vmem:[%s1] sm:$0xf]
      %v685 = vld [vmem:[%s1 + $0x4] sm:$0xf]
      %v686 = vld [vmem:[%s1 + $0x8] sm:$0xf]
      %v687 = vld [vmem:[%s1 + $0xc] sm:$0xf]
      %v688 = vld [vmem:[%s1 + $0x10] sm:$0xf]
      %v689 = vld [vmem:[%s1 + $0x14] sm:$0xf]
      %v690 = vld [vmem:[%s1 + $0x18] sm:$0xf]
      %v691 = vld [vmem:[%s1 + $0x1c] sm:$0xf]
      %v692 = vld [vmem:[%s4] sm:$0x1]
      %v694 = vlaneseq
      %v695 = vshrl.u32 %v694, 7
      %v696 = vsub.s32 0, %v695
      %v697 = vrot.slane %v692, %v696
      %v707 = vunpack.c.l.b16 %v684
      %v708 = vunpack.c.l.b16 %v685
      %v709 = vunpack.c.l.b16 %v686
      %v710 = vunpack.c.l.b16 %v687
      %v711 = vunpack.c.l.b16 %v688
      %v712 = vunpack.c.l.b16 %v689
      %v713 = vunpack.c.l.b16 %v690
      %v714 = vunpack.c.l.b16 %v691
      %v715 = vpack.c.b16 %v708, %v707
      %v716 = vpack.c.b16 %v710, %v709
      %v717 = vpack.c.b16 %v712, %v711
      %v718 = vpack.c.b16 %v714, %v713
      %vm723 = vcmask 523264
      %v725 = vsel %vm723, %v676, 0
      %v728 = vsel %vm723, %v677, 0
      %v731 = vsel %vm723, %v678, 0
      %v734 = vsel %vm723, %v679, 0
      %v737 = vsel %vm723, %v680, 0
      %v740 = vsel %vm723, %v681, 0
      %v743 = vsel %vm723, %v682, 0
      %v746 = vsel %vm723, %v683, 0
      %748 = vmatprep.subr.bf16.mxu0 0
      %749 = vmatpush1.bf16.msra.mxu0 %v715
      %750 = vmatprep.subr.bf16.mxu0 0
      %751 = vmatpush1.bf16.msra.mxu0 %v716
      %752 = vmatprep.subr.bf16.mxu0 0
      %753 = vmatpush1.bf16.msra.mxu0 %v717
      %754 = vmatprep.subr.bf16.mxu0 0
      %755 = vmatpush1.bf16.msra.mxu0 %v718
      %756 = vmatprep.subr.bf16.mxu0 0
      %757 = vmatpush1.bf16.msra.mxu0 0
      %758 = vmatprep.subr.bf16.mxu0 0
      %759 = vmatpush1.bf16.msra.mxu0 0
      %760 = vmatprep.subr.bf16.mxu0 0
      %761 = vmatpush1.bf16.msra.mxu0 0
      %762 = vmatprep.subr.bf16.mxu0 0
      %763 = vmatpush1.bf16.msra.mxu0 0
      %764 = vmatprep.subr.bf16.mxu0 0
      %765 = vmatpush1.bf16.msra.mxu0 0
      %766 = vmatprep.subr.bf16.mxu0 0
      %767 = vmatpush1.bf16.msra.mxu0 0
      %768 = vmatprep.subr.bf16.mxu0 0
      %769 = vmatpush1.bf16.msra.mxu0 0
      %770 = vmatprep.subr.bf16.mxu0 0
      %771 = vmatpush1.bf16.msra.mxu0 0
      %772 = vmatprep.subr.bf16.mxu0 0
      %773 = vmatpush1.bf16.msra.mxu0 0
      %774 = vmatprep.subr.bf16.mxu0 0
      %775 = vmatpush1.bf16.msra.mxu0 0
      %776 = vmatprep.subr.bf16.mxu0 0
      %777 = vmatpush1.bf16.msra.mxu0 0
      %778 = vmatprep.subr.bf16.mxu0 0
      %779 = vmatpush1.bf16.msra.mxu0 0
      %780 = vmatprep.mubr.bf16.mxu0 0
      %781 = vmatmul.mubr.bf16.gmra.mrb[0].mxu0 %v725
      %v782 = vpop.f32.mrb[0].mxu0
      %v783 = vadd.f32 %v697, %v782
      %v784 = vpop.f32.mrb[0].mxu0
      %v785 = vpop.f32.mrb[0].mxu0
      %v786 = vadd.f32 %v697, %v785
      %v787 = vpop.f32.mrb[0].mxu0
      %788 = vmatprep.mubr.bf16.mxu0 0
      %789 = vmatmul.mubr.bf16.gmra.mrb[0].mxu0 %v728
      %v790 = vpop.f32.mrb[0].mxu0
      %v791 = vadd.f32 %v697, %v790
      %v792 = vpop.f32.mrb[0].mxu0
      %v793 = vpop.f32.mrb[0].mxu0
      %v794 = vadd.f32 %v697, %v793
      %v795 = vpop.f32.mrb[0].mxu0
      %796 = vmatprep.mubr.bf16.mxu0 0
      %797 = vmatmul.mubr.bf16.gmra.mrb[0].mxu0 %v731
      %v798 = vpop.f32.mrb[0].mxu0
      %v799 = vadd.f32 %v697, %v798
      %v800 = vpop.f32.mrb[0].mxu0
      %v801 = vpop.f32.mrb[0].mxu0
      %v802 = vadd.f32 %v697, %v801
      %v803 = vpop.f32.mrb[0].mxu0
      %804 = vmatprep.mubr.bf16.mxu0 0
      %805 = vmatmul.mubr.bf16.gmra.mrb[0].mxu0 %v734
      %v806 = vpop.f32.mrb[0].mxu0
      %v807 = vadd.f32 %v697, %v806
      %v808 = vpop.f32.mrb[0].mxu0
      %v809 = vpop.f32.mrb[0].mxu0
      %v810 = vadd.f32 %v697, %v809
      %v811 = vpop.f32.mrb[0].mxu0
      %812 = vmatprep.mubr.bf16.mxu0 0
      %813 = vmatmul.mubr.bf16.gmra.mrb[0].mxu0 %v737
      %v814 = vpop.f32.mrb[0].mxu0
      %v815 = vadd.f32 %v697, %v814
      %v816 = vpop.f32.mrb[0].mxu0
      %v817 = vpop.f32.mrb[0].mxu0
      %v818 = vadd.f32 %v697, %v817
      %v819 = vpop.f32.mrb[0].mxu0
      %820 = vmatprep.mubr.bf16.mxu0 0
      %821 = vmatmul.mubr.bf16.gmra.mrb[0].mxu0 %v740
      %v822 = vpop.f32.mrb[0].mxu0
      %v823 = vadd.f32 %v697, %v822
      %v824 = vpop.f32.mrb[0].mxu0
      %v825 = vpop.f32.mrb[0].mxu0
      %v826 = vadd.f32 %v697, %v825
      %v827 = vpop.f32.mrb[0].mxu0
      %828 = vmatprep.mubr.bf16.mxu0 0
      %829 = vmatmul.mubr.bf16.gmra.mrb[0].mxu0 %v743
      %v830 = vpop.f32.mrb[0].mxu0
      %v831 = vadd.f32 %v697, %v830
      %v832 = vpop.f32.mrb[0].mxu0
      %v833 = vpop.f32.mrb[0].mxu0
      %v834 = vadd.f32 %v697, %v833
      %v835 = vpop.f32.mrb[0].mxu0
      %836 = vmatprep.mubr.bf16.mxu0 0
      %837 = vmatmul.mubr.bf16.gmra.mrb[0].mxu0 %v746
      %v838 = vpop.f32.mrb[0].mxu0
      %v839 = vadd.f32 %v697, %v838
      %v840 = vpop.f32.mrb[0].mxu0
      %v841 = vpop.f32.mrb[0].mxu0
      %v842 = vadd.f32 %v697, %v841
      %v843 = vpop.f32.mrb[0].mxu0
      %844 = vdwg.mxu0
      %v845 = vpack.c.bf16 %v786, %v783
      %v846 = vpack.c.bf16 %v794, %v791
      %v847 = vpack.c.bf16 %v802, %v799
      %v848 = vpack.c.bf16 %v810, %v807
      %v849 = vpack.c.bf16 %v818, %v815
      %v850 = vpack.c.bf16 %v826, %v823
      %v851 = vpack.c.bf16 %v834, %v831
      %v852 = vpack.c.bf16 %v842, %v839
      %v853 = vld [vmem:[#allocation3] sm:$0xff]
      %v854 = vld [vmem:[#allocation3 + $0x8] sm:$0xff]
      %v855 = vld [vmem:[#allocation3 + $0x10] sm:$0xff]
      %v856 = vld [vmem:[#allocation3 + $0x18] sm:$0xff]
      %vm857 = vcmask 64512
      %v859 = vsel %vm857, %v845, 0
      %v862 = vsel %vm857, %v846, 0
      %v865 = vsel %vm857, %v847, 0
      %v868 = vsel %vm857, %v848, 0
      %v871 = vsel %vm857, %v849, 0
      %v874 = vsel %vm857, %v850, 0
      %v877 = vsel %vm857, %v851, 0
      %v880 = vsel %vm857, %v852, 0
      %v883 = vsel %vm857, %v853, 0
      %v886 = vsel %vm857, %v854, 0
      %v889 = vsel %vm857, %v855, 0
      %v892 = vsel %vm857, %v856, 0
      %894 = vmatprep.subr.bf16.mxu0 0
      %895 = vmatpush1.bf16.xpose.msra.mxu0 %v883
      %896 = vmatprep.subr.bf16.mxu0 0
      %897 = vmatpush1.bf16.xpose.msra.mxu0 %v886
      %898 = vmatprep.subr.bf16.mxu0 0
      %899 = vmatpush1.bf16.xpose.msra.mxu0 %v889
      %900 = vmatprep.subr.bf16.mxu0 0
      %901 = vmatpush1.bf16.xpose.msra.mxu0 %v892
      %902 = vmatprep.subr.bf16.mxu0 0
      %903 = vmatpush1.bf16.xpose.msra.mxu0 0
      %904 = vmatprep.subr.bf16.mxu0 0
      %905 = vmatpush1.bf16.xpose.msra.mxu0 0
      %906 = vmatprep.subr.bf16.mxu0 0
      %907 = vmatpush1.bf16.xpose.msra.mxu0 0
      %908 = vmatprep.subr.bf16.mxu0 0
      %909 = vmatpush1.bf16.xpose.msra.mxu0 0
      %910 = vmatprep.subr.bf16.mxu0 0
      %911 = vmatpush1.bf16.xpose.msra.mxu0 0
      %912 = vmatprep.subr.bf16.mxu0 0
      %913 = vmatpush1.bf16.xpose.msra.mxu0 0
      %914 = vmatprep.subr.bf16.mxu0 0
      %915 = vmatpush1.bf16.xpose.msra.mxu0 0
      %916 = vmatprep.subr.bf16.mxu0 0
      %917 = vmatpush1.bf16.xpose.msra.mxu0 0
      %918 = vmatprep.subr.bf16.mxu0 0
      %919 = vmatpush1.bf16.xpose.msra.mxu0 0
      %920 = vmatprep.subr.bf16.mxu0 0
      %921 = vmatpush1.bf16.xpose.msra.mxu0 0
      %922 = vmatprep.subr.bf16.mxu0 0
      %923 = vmatpush1.bf16.xpose.msra.mxu0 0
      %924 = vmatprep.subr.bf16.mxu0 0
      %925 = vmatpush1.bf16.xpose.msra.mxu0 0
      %926 = vmatprep.mubr.bf16.mxu0 0
      %927 = vmatmul.mubr.bf16.gmra.mrb[0].mxu0 %v859
      %v928 = vpop.f32.mrb[0].mxu0
      %v929 = vadd.f32 0.0, %v928
      %v930 = vpop.f32.mrb[0].mxu0
      %v931 = vpop.f32.mrb[0].mxu0
      %v932 = vadd.f32 0.0, %v931
      %v933 = vpop.f32.mrb[0].mxu0
      %934 = vmatprep.mubr.bf16.mxu0 0
      %935 = vmatmul.mubr.bf16.gmra.mrb[0].mxu0 %v862
      %v936 = vpop.f32.mrb[0].mxu0
      %v937 = vadd.f32 0.0, %v936
      %v938 = vpop.f32.mrb[0].mxu0
      %v939 = vpop.f32.mrb[0].mxu0
      %v940 = vadd.f32 0.0, %v939
      %v941 = vpop.f32.mrb[0].mxu0
      %942 = vmatprep.mubr.bf16.mxu0 0
      %943 = vmatmul.mubr.bf16.gmra.mrb[0].mxu0 %v865
      %v944 = vpop.f32.mrb[0].mxu0
      %v945 = vadd.f32 0.0, %v944
      %v946 = vpop.f32.mrb[0].mxu0
      %v947 = vpop.f32.mrb[0].mxu0
      %v948 = vadd.f32 0.0, %v947
      %v949 = vpop.f32.mrb[0].mxu0
      %950 = vmatprep.mubr.bf16.mxu0 0
      %951 = vmatmul.mubr.bf16.gmra.mrb[0].mxu0 %v868
      %v952 = vpop.f32.mrb[0].mxu0
      %v953 = vadd.f32 0.0, %v952
      %v954 = vpop.f32.mrb[0].mxu0
      %v955 = vpop.f32.mrb[0].mxu0
      %v956 = vadd.f32 0.0, %v955
      %v957 = vpop.f32.mrb[0].mxu0
      %958 = vmatprep.mubr.bf16.mxu0 0
      %959 = vmatmul.mubr.bf16.gmra.mrb[0].mxu0 %v871
      %v960 = vpop.f32.mrb[0].mxu0
      %v961 = vadd.f32 0.0, %v960
      %v962 = vpop.f32.mrb[0].mxu0
      %v963 = vpop.f32.mrb[0].mxu0
      %v964 = vadd.f32 0.0, %v963
      %v965 = vpop.f32.mrb[0].mxu0
      %966 = vmatprep.mubr.bf16.mxu0 0
      %967 = vmatmul.mubr.bf16.gmra.mrb[0].mxu0 %v874
      %v968 = vpop.f32.mrb[0].mxu0
      %v969 = vadd.f32 0.0, %v968
      %v970 = vpop.f32.mrb[0].mxu0
      %v971 = vpop.f32.mrb[0].mxu0
      %v972 = vadd.f32 0.0, %v971
      %v973 = vpop.f32.mrb[0].mxu0
      %974 = vmatprep.mubr.bf16.mxu0 0
      %975 = vmatmul.mubr.bf16.gmra.mrb[0].mxu0 %v877
      %v976 = vpop.f32.mrb[0].mxu0
      %v977 = vadd.f32 0.0, %v976
      %v978 = vpop.f32.mrb[0].mxu0
      %v979 = vpop.f32.mrb[0].mxu0
      %v980 = vadd.f32 0.0, %v979
      %v981 = vpop.f32.mrb[0].mxu0
      %982 = vmatprep.mubr.bf16.mxu0 0
      %983 = vmatmul.mubr.bf16.gmra.mrb[0].mxu0 %v880
      %v984 = vpop.f32.mrb[0].mxu0
      %v985 = vadd.f32 0.0, %v984
      %v986 = vpop.f32.mrb[0].mxu0
      %v987 = vpop.f32.mrb[0].mxu0
      %v988 = vadd.f32 0.0, %v987
      %v989 = vpop.f32.mrb[0].mxu0
      %990 = vdwg.mxu0
      %v991 = vsel %vm723, %v929, -inf
      %992 = vmax.xlane.f32.xlu0 %v991
      %v993 = vpop.xlane.xlu0 %992
      %v994 = vsel %vm723, %v932, -inf
      %995 = vmax.xlane.f32.xlu0 %v994
      %v996 = vpop.xlane.xlu0 %995
      %v997 = vsel %vm723, %v937, -inf
      %998 = vmax.xlane.f32.xlu0 %v997
      %v999 = vpop.xlane.xlu0 %998
      %v1000 = vsel %vm723, %v940, -inf
      %1001 = vmax.xlane.f32.xlu0 %v1000
      %v1002 = vpop.xlane.xlu0 %1001
      %v1003 = vsel %vm723, %v945, -inf
      %1004 = vmax.xlane.f32.xlu0 %v1003
      %v1005 = vpop.xlane.xlu0 %1004
      %v1006 = vsel %vm723, %v948, -inf
      %1007 = vmax.xlane.f32.xlu0 %v1006
      %v1008 = vpop.xlane.xlu0 %1007
      %v1009 = vsel %vm723, %v953, -inf
      %1010 = vmax.xlane.f32.xlu0 %v1009
      %v1011 = vpop.xlane.xlu0 %1010
      %v1012 = vsel %vm723, %v956, -inf
      %1013 = vmax.xlane.f32.xlu0 %v1012
      %v1014 = vpop.xlane.xlu0 %1013
      %v1015 = vsel %vm723, %v961, -inf
      %1016 = vmax.xlane.f32.xlu0 %v1015
      %v1017 = vpop.xlane.xlu0 %1016
      %v1018 = vsel %vm723, %v964, -inf
      %1019 = vmax.xlane.f32.xlu0 %v1018
      %v1020 = vpop.xlane.xlu0 %1019
      %v1021 = vsel %vm723, %v969, -inf
      %1022 = vmax.xlane.f32.xlu0 %v1021
      %v1023 = vpop.xlane.xlu0 %1022
      %v1024 = vsel %vm723, %v972, -inf
      %1025 = vmax.xlane.f32.xlu0 %v1024
      %v1026 = vpop.xlane.xlu0 %1025
      %v1027 = vsel %vm723, %v977, -inf
      %1028 = vmax.xlane.f32.xlu0 %v1027
      %v1029 = vpop.xlane.xlu0 %1028
      %v1030 = vsel %vm723, %v980, -inf
      %1031 = vmax.xlane.f32.xlu0 %v1030
      %v1032 = vpop.xlane.xlu0 %1031
      %v1033 = vsel %vm723, %v985, -inf
      %1034 = vmax.xlane.f32.xlu0 %v1033
      %v1035 = vpop.xlane.xlu0 %1034
      %v1036 = vsel %vm723, %v988, -inf
      %1037 = vmax.xlane.f32.xlu0 %v1036
      %v1038 = vpop.xlane.xlu0 %1037
      %v1039 = vsub.f32 %v929, %v993
      %v1040 = vsub.f32 %v932, %v996
      %v1041 = vsub.f32 %v937, %v999
      %v1042 = vsub.f32 %v940, %v1002
      %v1043 = vsub.f32 %v945, %v1005
      %v1044 = vsub.f32 %v948, %v1008
      %v1045 = vsub.f32 %v953, %v1011
      %v1046 = vsub.f32 %v956, %v1014
      %v1047 = vsub.f32 %v961, %v1017
      %v1048 = vsub.f32 %v964, %v1020
      %v1049 = vsub.f32 %v969, %v1023
      %v1050 = vsub.f32 %v972, %v1026
      %v1051 = vsub.f32 %v977, %v1029
      %v1052 = vsub.f32 %v980, %v1032
      %v1053 = vsub.f32 %v985, %v1035
      %v1054 = vsub.f32 %v988, %v1038
      %v1055 = vmul.f32 %v1039, 1.442695
      %v1056 = vpow.pop %v1055
      %v1057 = vmul.f32 %v1040, 1.442695
      %v1058 = vpow.pop %v1057
      %v1059 = vmul.f32 %v1041, 1.442695
      %v1060 = vpow.pop %v1059
      %v1061 = vmul.f32 %v1042, 1.442695
      %v1062 = vpow.pop %v1061
      %v1063 = vmul.f32 %v1043, 1.442695
      %v1064 = vpow.pop %v1063
      %v1065 = vmul.f32 %v1044, 1.442695
      %v1066 = vpow.pop %v1065
      %v1067 = vmul.f32 %v1045, 1.442695
      %v1068 = vpow.pop %v1067
      %v1069 = vmul.f32 %v1046, 1.442695
      %v1070 = vpow.pop %v1069
      %v1071 = vmul.f32 %v1047, 1.442695
      %v1072 = vpow.pop %v1071
      %v1073 = vmul.f32 %v1048, 1.442695
      %v1074 = vpow.pop %v1073
      %v1075 = vmul.f32 %v1049, 1.442695
      %v1076 = vpow.pop %v1075
      %v1077 = vmul.f32 %v1050, 1.442695
      %v1078 = vpow.pop %v1077
      %v1079 = vmul.f32 %v1051, 1.442695
      %v1080 = vpow.pop %v1079
      %v1081 = vmul.f32 %v1052, 1.442695
      %v1082 = vpow.pop %v1081
      %v1083 = vmul.f32 %v1053, 1.442695
      %v1084 = vpow.pop %v1083
      %v1085 = vmul.f32 %v1054, 1.442695
      %v1086 = vpow.pop %v1085
      %v1087 = vsel %vm723, %v1056, 0.0
      %1088 = vadd.xlane.f32.xlu0 %v1087
      %v1089 = vpop.xlane.xlu0 %1088
      %v1090 = vsel %vm723, %v1058, 0.0
      %1091 = vadd.xlane.f32.xlu0 %v1090
      %v1092 = vpop.xlane.xlu0 %1091
      %v1093 = vsel %vm723, %v1060, 0.0
      %1094 = vadd.xlane.f32.xlu0 %v1093
      %v1095 = vpop.xlane.xlu0 %1094
      %v1096 = vsel %vm723, %v1062, 0.0
      %1097 = vadd.xlane.f32.xlu0 %v1096
      %v1098 = vpop.xlane.xlu0 %1097
      %v1099 = vsel %vm723, %v1064, 0.0
      %1100 = vadd.xlane.f32.xlu0 %v1099
      %v1101 = vpop.xlane.xlu0 %1100
      %v1102 = vsel %vm723, %v1066, 0.0
      %1103 = vadd.xlane.f32.xlu0 %v1102
      %v1104 = vpop.xlane.xlu0 %1103
      %v1105 = vsel %vm723, %v1068, 0.0
      %1106 = vadd.xlane.f32.xlu0 %v1105
      %v1107 = vpop.xlane.xlu0 %1106
      %v1108 = vsel %vm723, %v1070, 0.0
      %1109 = vadd.xlane.f32.xlu0 %v1108
      %v1110 = vpop.xlane.xlu0 %1109
      %v1111 = vsel %vm723, %v1072, 0.0
      %1112 = vadd.xlane.f32.xlu0 %v1111
      %v1113 = vpop.xlane.xlu0 %1112
      %v1114 = vsel %vm723, %v1074, 0.0
      %1115 = vadd.xlane.f32.xlu0 %v1114
      %v1116 = vpop.xlane.xlu0 %1115
      %v1117 = vsel %vm723, %v1076, 0.0
      %1118 = vadd.xlane.f32.xlu0 %v1117
      %v1119 = vpop.xlane.xlu0 %1118
      %v1120 = vsel %vm723, %v1078, 0.0
      %1121 = vadd.xlane.f32.xlu0 %v1120
      %v1122 = vpop.xlane.xlu0 %1121
      %v1123 = vsel %vm723, %v1080, 0.0
      %1124 = vadd.xlane.f32.xlu0 %v1123
      %v1125 = vpop.xlane.xlu0 %1124
      %v1126 = vsel %vm723, %v1082, 0.0
      %1127 = vadd.xlane.f32.xlu0 %v1126
      %v1128 = vpop.xlane.xlu0 %1127
      %v1129 = vsel %vm723, %v1084, 0.0
      %1130 = vadd.xlane.f32.xlu0 %v1129
      %v1131 = vpop.xlane.xlu0 %1130
      %v1132 = vsel %vm723, %v1086, 0.0
      %1133 = vadd.xlane.f32.xlu0 %v1132
      %v1134 = vpop.xlane.xlu0 %1133
      %v1135 = vpack.c.bf16 %v1058, %v1056
      %v1136 = vpack.c.bf16 %v1062, %v1060
      %v1137 = vpack.c.bf16 %v1066, %v1064
      %v1138 = vpack.c.bf16 %v1070, %v1068
      %v1139 = vpack.c.bf16 %v1074, %v1072
      %v1140 = vpack.c.bf16 %v1078, %v1076
      %v1141 = vpack.c.bf16 %v1082, %v1080
      %v1142 = vpack.c.bf16 %v1086, %v1084
      %v1143 = vld [vmem:[#allocation2] sm:$0xff]
      %v1144 = vld [vmem:[#allocation2 + $0x8] sm:$0xff]
      %v1145 = vld [vmem:[#allocation2 + $0x10] sm:$0xff]
      %v1146 = vld [vmem:[#allocation2 + $0x18] sm:$0xff]
      %v1148 = vsel %vm723, %v1135, 0
      %v1151 = vsel %vm723, %v1136, 0
      %v1154 = vsel %vm723, %v1137, 0
      %v1157 = vsel %vm723, %v1138, 0
      %v1160 = vsel %vm723, %v1139, 0
      %v1163 = vsel %vm723, %v1140, 0
      %v1166 = vsel %vm723, %v1141, 0
      %v1169 = vsel %vm723, %v1142, 0
      %1171 = vmatprep.subr.bf16.mxu0 0
      %1172 = vmatpush1.bf16.msra.mxu0 %v1143
      %1173 = vmatprep.subr.bf16.mxu0 0
      %1174 = vmatpush1.bf16.msra.mxu0 %v1144
      %1175 = vmatprep.subr.bf16.mxu0 0
      %1176 = vmatpush1.bf16.msra.mxu0 %v1145
      %1177 = vmatprep.subr.bf16.mxu0 0
      %1178 = vmatpush1.bf16.msra.mxu0 %v1146
      %1179 = vmatprep.subr.bf16.mxu0 0
      %1180 = vmatpush1.bf16.msra.mxu0 0
      %1181 = vmatprep.subr.bf16.mxu0 0
      %1182 = vmatpush1.bf16.msra.mxu0 0
      %1183 = vmatprep.subr.bf16.mxu0 0
      %1184 = vmatpush1.bf16.msra.mxu0 0
      %1185 = vmatprep.subr.bf16.mxu0 0
      %1186 = vmatpush1.bf16.msra.mxu0 0
      %1187 = vmatprep.subr.bf16.mxu0 0
      %1188 = vmatpush1.bf16.msra.mxu0 0
      %1189 = vmatprep.subr.bf16.mxu0 0
      %1190 = vmatpush1.bf16.msra.mxu0 0
      %1191 = vmatprep.subr.bf16.mxu0 0
      %1192 = vmatpush1.bf16.msra.mxu0 0
      %1193 = vmatprep.subr.bf16.mxu0 0
      %1194 = vmatpush1.bf16.msra.mxu0 0
      %1195 = vmatprep.subr.bf16.mxu0 0
      %1196 = vmatpush1.bf16.msra.mxu0 0
      %1197 = vmatprep.subr.bf16.mxu0 0
      %1198 = vmatpush1.bf16.msra.mxu0 0
      %1199 = vmatprep.subr.bf16.mxu0 0
      %1200 = vmatpush1.bf16.msra.mxu0 0
      %1201 = vmatprep.subr.bf16.mxu0 0
      %1202 = vmatpush1.bf16.msra.mxu0 0
      %1203 = vmatprep.mubr.bf16.mxu0 0
      %1204 = vmatmul.mubr.bf16.gmra.mrb[0].mxu0 %v1148
      %v1205 = vpop.f32.mrb[0].mxu0
      %v1206 = vadd.f32 0.0, %v1205
      %v1207 = vpop.f32.mrb[0].mxu0
      %v1208 = vpop.f32.mrb[0].mxu0
      %v1209 = vadd.f32 0.0, %v1208
      %v1210 = vpop.f32.mrb[0].mxu0
      %1211 = vmatprep.mubr.bf16.mxu0 0
      %1212 = vmatmul.mubr.bf16.gmra.mrb[0].mxu0 %v1151
      %v1213 = vpop.f32.mrb[0].mxu0
      %v1214 = vadd.f32 0.0, %v1213
      %v1215 = vpop.f32.mrb[0].mxu0
      %v1216 = vpop.f32.mrb[0].mxu0
      %v1217 = vadd.f32 0.0, %v1216
      %v1218 = vpop.f32.mrb[0].mxu0
      %1219 = vmatprep.mubr.bf16.mxu0 0
      %1220 = vmatmul.mubr.bf16.gmra.mrb[0].mxu0 %v1154
      %v1221 = vpop.f32.mrb[0].mxu0
      %v1222 = vadd.f32 0.0, %v1221
      %v1223 = vpop.f32.mrb[0].mxu0
      %v1224 = vpop.f32.mrb[0].mxu0
      %v1225 = vadd.f32 0.0, %v1224
      %v1226 = vpop.f32.mrb[0].mxu0
      %1227 = vmatprep.mubr.bf16.mxu0 0
      %1228 = vmatmul.mubr.bf16.gmra.mrb[0].mxu0 %v1157
      %v1229 = vpop.f32.mrb[0].mxu0
      %v1230 = vadd.f32 0.0, %v1229
      %v1231 = vpop.f32.mrb[0].mxu0
      %v1232 = vpop.f32.mrb[0].mxu0
      %v1233 = vadd.f32 0.0, %v1232
      %v1234 = vpop.f32.mrb[0].mxu0
      %1235 = vmatprep.mubr.bf16.mxu0 0
      %1236 = vmatmul.mubr.bf16.gmra.mrb[0].mxu0 %v1160
      %v1237 = vpop.f32.mrb[0].mxu0
      %v1238 = vadd.f32 0.0, %v1237
      %v1239 = vpop.f32.mrb[0].mxu0
      %v1240 = vpop.f32.mrb[0].mxu0
      %v1241 = vadd.f32 0.0, %v1240
      %v1242 = vpop.f32.mrb[0].mxu0
      %1243 = vmatprep.mubr.bf16.mxu0 0
      %1244 = vmatmul.mubr.bf16.gmra.mrb[0].mxu0 %v1163
      %v1245 = vpop.f32.mrb[0].mxu0
      %v1246 = vadd.f32 0.0, %v1245
      %v1247 = vpop.f32.mrb[0].mxu0
      %v1248 = vpop.f32.mrb[0].mxu0
      %v1249 = vadd.f32 0.0, %v1248
      %v1250 = vpop.f32.mrb[0].mxu0
      %1251 = vmatprep.mubr.bf16.mxu0 0
      %1252 = vmatmul.mubr.bf16.gmra.mrb[0].mxu0 %v1166
      %v1253 = vpop.f32.mrb[0].mxu0
      %v1254 = vadd.f32 0.0, %v1253
      %v1255 = vpop.f32.mrb[0].mxu0
      %v1256 = vpop.f32.mrb[0].mxu0
      %v1257 = vadd.f32 0.0, %v1256
      %v1258 = vpop.f32.mrb[0].mxu0
      %1259 = vmatprep.mubr.bf16.mxu0 0
      %1260 = vmatmul.mubr.bf16.gmra.mrb[0].mxu0 %v1169
      %v1261 = vpop.f32.mrb[0].mxu0
      %v1262 = vadd.f32 0.0, %v1261
      %v1263 = vpop.f32.mrb[0].mxu0
      %v1264 = vpop.f32.mrb[0].mxu0
      %v1265 = vadd.f32 0.0, %v1264
      %v1266 = vpop.f32.mrb[0].mxu0
      %1267 = vdwg.mxu0
      %v1268 = vrcp.pop %v1089
      %v1269 = vrcp.pop %v1092
      %v1270 = vrcp.pop %v1095
      %v1271 = vrcp.pop %v1098
      %v1272 = vrcp.pop %v1101
      %v1273 = vrcp.pop %v1104
      %v1274 = vrcp.pop %v1107
      %v1275 = vrcp.pop %v1110
      %v1276 = vrcp.pop %v1113
      %v1277 = vrcp.pop %v1116
      %v1278 = vrcp.pop %v1119
      %v1279 = vrcp.pop %v1122
      %v1280 = vrcp.pop %v1125
      %v1281 = vrcp.pop %v1128
      %v1282 = vrcp.pop %v1131
      %v1283 = vrcp.pop %v1134
      %v1284 = vmul.f32 %v1206, %v1268
      %v1285 = vmul.f32 %v1209, %v1269
      %v1286 = vmul.f32 %v1214, %v1270
      %v1287 = vmul.f32 %v1217, %v1271
      %v1288 = vmul.f32 %v1222, %v1272
      %v1289 = vmul.f32 %v1225, %v1273
      %v1290 = vmul.f32 %v1230, %v1274
      %v1291 = vmul.f32 %v1233, %v1275
      %v1292 = vmul.f32 %v1238, %v1276
      %v1293 = vmul.f32 %v1241, %v1277
      %v1294 = vmul.f32 %v1246, %v1278
      %v1295 = vmul.f32 %v1249, %v1279
      %v1296 = vmul.f32 %v1254, %v1280
      %v1297 = vmul.f32 %v1257, %v1281
      %v1298 = vmul.f32 %v1262, %v1282
      %v1299 = vmul.f32 %v1265, %v1283
      %v1300 = vpack.c.bf16 %v1285, %v1284
      %v1301 = vpack.c.bf16 %v1287, %v1286
      %v1302 = vpack.c.bf16 %v1289, %v1288
      %v1303 = vpack.c.bf16 %v1291, %v1290
      %v1304 = vpack.c.bf16 %v1293, %v1292
      %v1305 = vpack.c.bf16 %v1295, %v1294
      %v1306 = vpack.c.bf16 %v1297, %v1296
      %v1307 = vpack.c.bf16 %v1299, %v1298
      %v1308 = vld [vmem:[%s3] sm:$0xf]
      %v1309 = vld [vmem:[%s3 + $0x4] sm:$0xf]
      %v1310 = vld [vmem:[%s3 + $0x8] sm:$0xf]
      %v1311 = vld [vmem:[%s3 + $0xc] sm:$0xf]
      %v1312 = vld [vmem:[%s6] sm:$0x1]
      %v1314 = vlaneseq
      %v1315 = vshrl.u32 %v1314, 7
      %v1316 = vsub.s32 0, %v1315
      %v1317 = vrot.slane %v1312, %v1316
      %v1323 = vunpack.c.l.b16 %v1308
      %v1324 = vunpack.c.l.b16 %v1309
      %v1325 = vunpack.c.l.b16 %v1310
      %v1326 = vunpack.c.l.b16 %v1311
      %v1327 = vpack.c.b16 %v1324, %v1323
      %v1328 = vpack.c.b16 %v1326, %v1325
      %vm1331 = vcmask 261120
      %v1333 = vsel %vm1331, %v1300, 0
      %v1336 = vsel %vm1331, %v1301, 0
      %v1339 = vsel %vm1331, %v1302, 0
      %v1342 = vsel %vm1331, %v1303, 0
      %v1345 = vsel %vm1331, %v1304, 0
      %v1348 = vsel %vm1331, %v1305, 0
      %v1351 = vsel %vm1331, %v1306, 0
      %v1354 = vsel %vm1331, %v1307, 0
      %1356 = vmatprep.subr.bf16.mxu0 0
      %1357 = vmatpush1.bf16.msra.mxu0 %v1327
      %1358 = vmatprep.subr.bf16.mxu0 0
      %1359 = vmatpush1.bf16.msra.mxu0 %v1328
      %1360 = vmatprep.subr.bf16.mxu0 0
      %1361 = vmatpush1.bf16.msra.mxu0 0
      %1362 = vmatprep.subr.bf16.mxu0 0
      %1363 = vmatpush1.bf16.msra.mxu0 0
      %1364 = vmatprep.subr.bf16.mxu0 0
      %1365 = vmatpush1.bf16.msra.mxu0 0
      %1366 = vmatprep.subr.bf16.mxu0 0
      %1367 = vmatpush1.bf16.msra.mxu0 0
      %1368 = vmatprep.subr.bf16.mxu0 0
      %1369 = vmatpush1.bf16.msra.mxu0 0
      %1370 = vmatprep.subr.bf16.mxu0 0
      %1371 = vmatpush1.bf16.msra.mxu0 0
      %1372 = vmatprep.subr.bf16.mxu0 0
      %1373 = vmatpush1.bf16.msra.mxu0 0
      %1374 = vmatprep.subr.bf16.mxu0 0
      %1375 = vmatpush1.bf16.msra.mxu0 0
      %1376 = vmatprep.subr.bf16.mxu0 0
      %1377 = vmatpush1.bf16.msra.mxu0 0
      %1378 = vmatprep.subr.bf16.mxu0 0
      %1379 = vmatpush1.bf16.msra.mxu0 0
      %1380 = vmatprep.subr.bf16.mxu0 0
      %1381 = vmatpush1.bf16.msra.mxu0 0
      %1382 = vmatprep.subr.bf16.mxu0 0
      %1383 = vmatpush1.bf16.msra.mxu0 0
      %1384 = vmatprep.subr.bf16.mxu0 0
      %1385 = vmatpush1.bf16.msra.mxu0 0
      %1386 = vmatprep.subr.bf16.mxu0 0
      %1387 = vmatpush1.bf16.msra.mxu0 0
      %1388 = vmatprep.mubr.bf16.mxu0 0
      %1389 = vmatmul.mubr.bf16.gmra.mrb[0].mxu0 %v1333
      %v1390 = vpop.f32.mrb[0].mxu0
      %v1391 = vadd.f32 %v1317, %v1390
      %v1392 = vpop.f32.mrb[0].mxu0
      %v1393 = vpop.f32.mrb[0].mxu0
      %v1394 = vadd.f32 %v1317, %v1393
      %v1395 = vpop.f32.mrb[0].mxu0
      %1396 = vmatprep.mubr.bf16.mxu0 0
      %1397 = vmatmul.mubr.bf16.gmra.mrb[0].mxu0 %v1336
      %v1398 = vpop.f32.mrb[0].mxu0
      %v1399 = vadd.f32 %v1317, %v1398
      %v1400 = vpop.f32.mrb[0].mxu0
      %v1401 = vpop.f32.mrb[0].mxu0
      %v1402 = vadd.f32 %v1317, %v1401
      %v1403 = vpop.f32.mrb[0].mxu0
      %1404 = vmatprep.mubr.bf16.mxu0 0
      %1405 = vmatmul.mubr.bf16.gmra.mrb[0].mxu0 %v1339
      %v1406 = vpop.f32.mrb[0].mxu0
      %v1407 = vadd.f32 %v1317, %v1406
      %v1408 = vpop.f32.mrb[0].mxu0
      %v1409 = vpop.f32.mrb[0].mxu0
      %v1410 = vadd.f32 %v1317, %v1409
      %v1411 = vpop.f32.mrb[0].mxu0
      %1412 = vmatprep.mubr.bf16.mxu0 0
      %1413 = vmatmul.mubr.bf16.gmra.mrb[0].mxu0 %v1342
      %v1414 = vpop.f32.mrb[0].mxu0
      %v1415 = vadd.f32 %v1317, %v1414
      %v1416 = vpop.f32.mrb[0].mxu0
      %v1417 = vpop.f32.mrb[0].mxu0
      %v1418 = vadd.f32 %v1317, %v1417
      %v1419 = vpop.f32.mrb[0].mxu0
      %1420 = vmatprep.mubr.bf16.mxu0 0
      %1421 = vmatmul.mubr.bf16.gmra.mrb[0].mxu0 %v1345
      %v1422 = vpop.f32.mrb[0].mxu0
      %v1423 = vadd.f32 %v1317, %v1422
      %v1424 = vpop.f32.mrb[0].mxu0
      %v1425 = vpop.f32.mrb[0].mxu0
      %v1426 = vadd.f32 %v1317, %v1425
      %v1427 = vpop.f32.mrb[0].mxu0
      %1428 = vmatprep.mubr.bf16.mxu0 0
      %1429 = vmatmul.mubr.bf16.gmra.mrb[0].mxu0 %v1348
      %v1430 = vpop.f32.mrb[0].mxu0
      %v1431 = vadd.f32 %v1317, %v1430
      %v1432 = vpop.f32.mrb[0].mxu0
      %v1433 = vpop.f32.mrb[0].mxu0
      %v1434 = vadd.f32 %v1317, %v1433
      %v1435 = vpop.f32.mrb[0].mxu0
      %1436 = vmatprep.mubr.bf16.mxu0 0
      %1437 = vmatmul.mubr.bf16.gmra.mrb[0].mxu0 %v1351
      %v1438 = vpop.f32.mrb[0].mxu0
      %v1439 = vadd.f32 %v1317, %v1438
      %v1440 = vpop.f32.mrb[0].mxu0
      %v1441 = vpop.f32.mrb[0].mxu0
      %v1442 = vadd.f32 %v1317, %v1441
      %v1443 = vpop.f32.mrb[0].mxu0
      %1444 = vmatprep.mubr.bf16.mxu0 0
      %1445 = vmatmul.mubr.bf16.gmra.mrb[0].mxu0 %v1354
      %v1446 = vpop.f32.mrb[0].mxu0
      %v1447 = vadd.f32 %v1317, %v1446
      %v1448 = vpop.f32.mrb[0].mxu0
      %v1449 = vpop.f32.mrb[0].mxu0
      %v1450 = vadd.f32 %v1317, %v1449
      %v1451 = vpop.f32.mrb[0].mxu0
      %1452 = vdwg.mxu0
      %v1453 = vadd.f32 %v660, %v1391
      %v1454 = vadd.f32 %v661, %v1394
      %v1455 = vadd.f32 %v662, %v1399
      %v1456 = vadd.f32 %v663, %v1402
      %v1457 = vadd.f32 %v664, %v1407
      %v1458 = vadd.f32 %v665, %v1410
      %v1459 = vadd.f32 %v666, %v1415
      %v1460 = vadd.f32 %v667, %v1418
      %v1461 = vadd.f32 %v668, %v1423
      %v1462 = vadd.f32 %v669, %v1426
      %v1463 = vadd.f32 %v670, %v1431
      %v1464 = vadd.f32 %v671, %v1434
      %v1465 = vadd.f32 %v672, %v1439
      %v1466 = vadd.f32 %v673, %v1442
      %v1467 = vadd.f32 %v674, %v1447
      %v1468 = vadd.f32 %v675, %v1450
      %1469 = vst.msk [vmem:[%s300] sm:$0xff] %vm723, %v1453
      %1470 = vst.msk [vmem:[%s300 + $0x8] sm:$0xff] %vm723, %v1454
      %1471 = vst.msk [vmem:[%s300 + $0x10] sm:$0xff] %vm723, %v1455
      %1472 = vst.msk [vmem:[%s300 + $0x18] sm:$0xff] %vm723, %v1456
      %1473 = vst.msk [vmem:[%s300 + $0x20] sm:$0xff] %vm723, %v1457
      %1474 = vst.msk [vmem:[%s300 + $0x28] sm:$0xff] %vm723, %v1458
      %1475 = vst.msk [vmem:[%s300 + $0x30] sm:$0xff] %vm723, %v1459
      %1476 = vst.msk [vmem:[%s300 + $0x38] sm:$0xff] %vm723, %v1460
      %1477 = vst.msk [vmem:[%s300 + $0x40] sm:$0xff] %vm723, %v1461
      %1478 = vst.msk [vmem:[%s300 + $0x48] sm:$0xff] %vm723, %v1462
      %1479 = vst.msk [vmem:[%s300 + $0x50] sm:$0xff] %vm723, %v1463
      %1480 = vst.msk [vmem:[%s300 + $0x58] sm:$0xff] %vm723, %v1464
      %1481 = vst.msk [vmem:[%s300 + $0x60] sm:$0xff] %vm723, %v1465
      %1482 = vst.msk [vmem:[%s300 + $0x68] sm:$0xff] %vm723, %v1466
      %1483 = vst.msk [vmem:[%s300 + $0x70] sm:$0xff] %vm723, %v1467
      %1484 = vst.msk [vmem:[%s300 + $0x78] sm:$0xff] %vm723, %v1468
      %s1485 = smul.u32 16, %s23
      %p1486 = scmp.lt.s32.totalorder %s22, 1
      %s1487 = scalar_select %p1486, %s22, 1
      %p1488 = scmp.lt.s32.totalorder %s1485, 31
      %s1489 = scalar_select %p1488, %s1485, 31
      %s1490 = smul.addr %s1487, 32
      %s1491 = sadd.s32 %s1489, %s1490
      %s1492 = smul.addr %s1491, 8
      %s1493 = scalar_lea.vmem %s7, %s1492
      // Predicated region
      $region53: #{self_attn_forward.1} parent=47 // pred_check
        %p1494 = pneg %p202
      $region54: #{self_attn_forward.1} parent=47 // pred_check_branch
        %1496 = sbr.rel (%p1494) target = $region56
      $region55: #{self_attn_forward.1} parent=47 // pred_region
        %s1497 = smul.u32 16, %s23
      $region56: #{self_attn_forward.1} parent=47 // pred_fallthru
        _
    $region48: #{self_attn_forward.1} parent=5 // pred_fallthru
      _
    %p1498 = scmp.le.s32.totalorder 2, %s13
    // Predicated region
    $region57: #{self_attn_forward.1} parent=5 // pred_check
      %p1499 = pneg %p1498
    $region58: #{self_attn_forward.1} parent=5 // pred_check_branch
      %1501 = sbr.rel (%p1499) target = $region60
    $region59: #{self_attn_forward.1} parent=5 // pred_region
      %s1502 = ssub.s32 %s13, 2
      // Predicated region
      $region61: #{self_attn_forward.1} parent=59 // pred_check
        %p1503 = pneg %p208
      $region62: #{self_attn_forward.1} parent=59 // pred_check_branch
        %1505 = sbr.rel (%p1503) target = $region64
      $region63: #{self_attn_forward.1} parent=59 // pred_region
        %s1506 = smul.u32 16, %s25
        %p1507 = scmp.lt.s32.totalorder %s24, 1
        %s1508 = scalar_select %p1507, %s24, 1
        %p1509 = scmp.lt.s32.totalorder %s1506, 31
        %s1510 = scalar_select %p1509, %s1506, 31
        %s1511 = smul.addr %s1508, 32
        %s1512 = sadd.s32 %s1510, %s1511
        %s1513 = smul.addr %s1512, 8
        %s1514 = scalar_lea.vmem %s7, %s1513
      $region64: #{self_attn_forward.1} parent=59 // pred_fallthru
        _
    $region60: #{self_attn_forward.1} parent=5 // pred_fallthru
      _
  $region6: #{self_attn_forward.1} parent=0 // loop_footer
    %s17 = sadd.s32 1, %s13
  $region7: #{self_attn_forward.1} parent=0 // loop_footer_branch
    %12 = sbr.rel target = $region3
  $region8: #{self_attn_forward.1} parent=0 // loop_exit
    _

</llo_original>
